<compile_context>
chip_gen: v6e
topology: v6e:2x2x1
jax: 0.10.0
libtpu: 0.0.40
codegen_flags: <defaults>
</compile_context>

<pallas_src>
import jax
import jax.numpy as jnp
from jax.experimental import pallas as pl
from jax.experimental.pallas import tpu as pltpu

# ---- Small, module-consistent sizes -----------------------------------------
CHANNELS = 32                    # small stand-in for the default channels=512
FEATURES = 8                     # small stand-in for the default features=26
FLAT = CHANNELS * FEATURES       # 256 = classifier input dim
H1, H2, H3 = 512, 256, 128       # fixed hidden sizes from the module
NUM_CLASSES = 7
D_IN = 64                        # input dim fed to the (synthetic) external_mapping
NC_PAD = 128                     # num_classes padded to a full lane
BIAS_TOTAL = FLAT + H1 + H2 + H3 + NC_PAD   # 1280 (all offsets lane-aligned)
OUT_W = FLAT + NC_PAD            # fused [z | logits_padded] output width = 384


def _round_up(n, m):
    return ((n + m - 1) // m) * m


def _choose_tile_b(b):
    """128..512 row tiles; >=2 grid steps whenever B > 128 (v7x dual-TC)."""
    return max(128, min(512, _round_up(max(b // 4, 1), 128)))


# ---- Pallas kernel: (folded) external_mapping Linear + 4-layer classifier ----
def style_encoder_kernel(x_ref, wm_ref, wmw1_ref, w2_ref, w3_ref, w4_ref, b_ref,
                         out_ref):
    # Packed-bias layout: [bm:0 | b1':256 | b2:768 | b3:1024 | b4:1152] (lane-aligned).
    bm = b_ref[:, :FLAT]
    b1 = b_ref[:, FLAT:FLAT + H1]
    b2 = b_ref[:, FLAT + H1:FLAT + H1 + H2]
    b3 = b_ref[:, FLAT + H1 + H2:FLAT + H1 + H2 + H3]
    b4 = b_ref[:, FLAT + H1 + H2 + H3:]

    x = x_ref[...].astype(jnp.bfloat16)                          # (TILE_B, D_IN)

    # external_mapping (synthetic): single Linear D_IN -> CHANNELS*FEATURES.
    # TODO(synk): the real external_mapping is an arbitrary user-supplied module;
    # a deterministic Linear stands in for it here.
    z = jnp.dot(x, wm_ref[...], preferred_element_type=jnp.float32) + bm

    # Layer 1 uses the pre-folded (wm @ w1): K=64 contraction, independent of z,
    # so both matmuls overlap in the MXU pipeline. Bias/ReLU stay f32 (VPU).
    h = jnp.maximum(
        jnp.dot(x, wmw1_ref[...], preferred_element_type=jnp.float32) + b1, 0.0)
    h = jnp.maximum(
        jnp.dot(h.astype(jnp.bfloat16), w2_ref[...],
                preferred_element_type=jnp.float32) + b2, 0.0)
    h = jnp.maximum(
        jnp.dot(h.astype(jnp.bfloat16), w3_ref[...],
                preferred_element_type=jnp.float32) + b3, 0.0)
    logits = jnp.dot(h.astype(jnp.bfloat16), w4_ref[...],
                     preferred_element_type=jnp.float32) + b4

    # Single fused, lane-dense store: [ z (256) | logits_padded (128) ].
    out_ref[...] = jnp.concatenate([z, logits], axis=1)


# ---- One-time parameter preparation (fold + pad + bf16 cast + bias packing) --
def prepare_params(params):
    (wm, bm, w1, b1, w2, b2, w3, b3, w4, b4) = params
    # Fold the synthetic external_mapping Linear into layer 1. Valid only because
    # external_mapping is a pure Linear and Dropout is identity at inference.
    # TODO(synk): disable this fold when a real (non-linear) external_mapping is used.
    wm_w1 = jnp.dot(wm, w1)                                   # (D_IN, H1) f32
    b1_f = jnp.dot(bm, w1) + b1                               # (1, H1)    f32
    # Pad final layer's output dim (7 -> 128) with zeros; sliced back after the call.
    w4_p = jnp.zeros((H3, NC_PAD), jnp.float32).at[:, :NUM_CLASSES].set(w4)
    b4_p = jnp.zeros((1, NC_PAD), jnp.float32).at[:, :NUM_CLASSES].set(b4)
    weights = tuple(w.astype(jnp.bfloat16) for w in (wm, wm_w1, w2, w3, w4_p))
    biases = jnp.concatenate([bm, b1_f, b2, b3, b4_p], axis=1).astype(jnp.float32)
    return weights + (biases,)      # (wm, wm_w1, w2, w3, w4, biases)


# ---- Forward wrapper ---------------------------------------------------------
def style_encoder_forward(x, prepared):
    """x: (B, D_IN) float32; prepared = prepare_params(params).
    Returns (logits (B, NUM_CLASSES) f32, z (B, FLAT) f32)."""
    wm, wmw1, w2, w3, w4, biases = prepared
    B = x.shape[0]
    tile_b = _choose_tile_b(B)
    Bp = _round_up(max(B, tile_b), tile_b)
    x_p = jnp.pad(x, ((0, Bp - B), (0, 0)))

    def wspec(shape):
        # Weights / biases: whole array, constant block index -> fetched once and
        # resident in VMEM; single-buffered (no need for a revolving double buffer).
        return pl.BlockSpec(shape, lambda i: (0, 0), pipeline_mode=pl.Buffered(1))

    out = pl.pallas_call(
        style_encoder_kernel,
        out_shape=jax.ShapeDtypeStruct((Bp, OUT_W), jnp.float32),
        grid=(Bp // tile_b,),
        in_specs=[
            pl.BlockSpec((tile_b, D_IN), lambda i: (i, 0)),   # x: tiled over batch
            wspec((D_IN, FLAT)),                              # wm
            wspec((D_IN, H1)),                                # wm @ w1 (folded)
            wspec((H1, H2)),                                  # w2
            wspec((H2, H3)),                                  # w3
            wspec((H3, NC_PAD)),                              # w4 (padded)
            wspec((1, BIAS_TOTAL)),                           # packed biases
        ],
        out_specs=pl.BlockSpec((tile_b, OUT_W), lambda i: (i, 0)),
        compiler_params=pltpu.CompilerParams(
            dimension_semantics=("parallel",)),
    )(x_p, wm, wmw1, w2, w3, w4, biases)

    z = out[:B, :FLAT]
    logits = out[:B, FLAT:FLAT + NUM_CLASSES]
    return logits, z


# ---- Deterministic parameter construction -----------------------------------
def make_params(key):
    def linear(k, fan_in, fan_out):
        kw, kb = jax.random.split(k)
        scale = 1.0 / jnp.sqrt(jnp.float32(fan_in))
        w = jax.random.uniform(kw, (fan_in, fan_out), jnp.float32, -scale, scale)
        b = jax.random.uniform(kb, (1, fan_out), jnp.float32, -scale, scale)
        return w, b

    ks = jax.random.split(key, 5)
    wm, bm = linear(ks[0], D_IN, FLAT)       # synthetic external_mapping
    w1, b1 = linear(ks[1], FLAT, H1)
    w2, b2 = linear(ks[2], H1, H2)
    w3, b3 = linear(ks[3], H2, H3)
    w4, b4 = linear(ks[4], H3, NUM_CLASSES)
    return (wm, bm, w1, b1, w2, b2, w3, b3, w4, b4)


def reference_forward(x, params):
    """Pure f32 reference following the original (unfused) module math."""
    (wm, bm, w1, b1, w2, b2, w3, b3, w4, b4) = params
    z = jnp.dot(x, wm) + bm
    h = jnp.maximum(jnp.dot(z, w1) + b1, 0.0)
    h = jnp.maximum(jnp.dot(h, w2) + b2, 0.0)
    h = jnp.maximum(jnp.dot(h, w3) + b3, 0.0)
    logits = jnp.dot(h, w4) + b4
    return logits, z


def _check(x, params, prepared, fwd):
    logits, z = fwd(x, prepared)
    jax.block_until_ready((logits, z))
    ref_logits, ref_z = reference_forward(x, params)
    B = x.shape[0]
    assert logits.shape == (B, NUM_CLASSES) and z.shape == (B, FLAT)
    assert jnp.allclose(logits, ref_logits, atol=2e-2, rtol=2e-2)
    assert jnp.allclose(z, ref_z, atol=2e-2, rtol=2e-2)


if __name__ == "__main__":
    key = jax.random.PRNGKey(0)
    k_x, k_x2, k_p = jax.random.split(key, 3)

    params = make_params(k_p)
    prepared = prepare_params(params)          # one-time fold / pad / cast / pack
    fwd = jax.jit(style_encoder_forward)

    # Small-shape smoke test (single grid step).
    x = jax.random.normal(k_x, (2, D_IN), jnp.float32)
    _check(x, params, prepared, fwd)

    # Multi-tile test: exercises the parallel batch grid and the padding slice.
    x2 = jax.random.normal(k_x2, (300, D_IN), jnp.float32)
    _check(x2, params, prepared, fwd)

    print("KERNEL_OK")
</pallas_src>

<mosaic_0001>
module attributes {stable_mosaic.version = 11 : i64} {
  func.func @style_encoder_kernel(%arg0: i32, %arg1: memref<128x64xf32, #tpu.memory_space<vmem>>, %arg2: memref<64x256xbf16, #tpu.memory_space<vmem>>, %arg3: memref<64x512xbf16, #tpu.memory_space<vmem>>, %arg4: memref<512x256xbf16, #tpu.memory_space<vmem>>, %arg5: memref<256x128xbf16, #tpu.memory_space<vmem>>, %arg6: memref<128x128xbf16, #tpu.memory_space<vmem>>, %arg7: memref<1x1280xf32, #tpu.memory_space<vmem>>, %arg8: memref<128x384xf32, #tpu.memory_space<vmem>>) attributes {dimension_semantics = [#tpu.dimension_semantics<parallel>], iteration_bounds = array<i64: 1>, scalar_prefetch = 0 : i64, scratch_operands = 0 : i64, tpu.core_type = #tpu.core_type<tc>, window_params = [{transform_indices = @transform_0, window_bounds = array<i64: 128, 64>}, {pipeline_mode = #tpu.pipeline_mode<synchronous>, transform_indices = @transform_1, window_bounds = array<i64: 64, 256>}, {pipeline_mode = #tpu.pipeline_mode<synchronous>, transform_indices = @transform_2, window_bounds = array<i64: 64, 512>}, {pipeline_mode = #tpu.pipeline_mode<synchronous>, transform_indices = @transform_3, window_bounds = array<i64: 512, 256>}, {pipeline_mode = #tpu.pipeline_mode<synchronous>, transform_indices = @transform_4, window_bounds = array<i64: 256, 128>}, {pipeline_mode = #tpu.pipeline_mode<synchronous>, transform_indices = @transform_5, window_bounds = array<i64: 128, 128>}, {pipeline_mode = #tpu.pipeline_mode<synchronous>, transform_indices = @transform_6, window_bounds = array<i64: 1, 1280>}, {transform_indices = @transform_7, window_bounds = array<i64: 128, 384>}]} {
    %c0 = arith.constant 0 : index
    %c0_0 = arith.constant 0 : index
    %0 = vector.load %arg7[%c0, %c0_0] : memref<1x1280xf32, #tpu.memory_space<vmem>>, vector<1x256xf32>
    %c0_1 = arith.constant 0 : index
    %c256 = arith.constant 256 : index
    %1 = vector.load %arg7[%c0_1, %c256] : memref<1x1280xf32, #tpu.memory_space<vmem>>, vector<1x512xf32>
    %c0_2 = arith.constant 0 : index
    %c768 = arith.constant 768 : index
    %2 = vector.load %arg7[%c0_2, %c768] : memref<1x1280xf32, #tpu.memory_space<vmem>>, vector<1x256xf32>
    %c0_3 = arith.constant 0 : index
    %c1024 = arith.constant 1024 : index
    %3 = vector.load %arg7[%c0_3, %c1024] : memref<1x1280xf32, #tpu.memory_space<vmem>>, vector<1x128xf32>
    %c0_4 = arith.constant 0 : index
    %c1152 = arith.constant 1152 : index
    %4 = vector.load %arg7[%c0_4, %c1152] : memref<1x1280xf32, #tpu.memory_space<vmem>>, vector<1x128xf32>
    %c0_5 = arith.constant 0 : index
    %c0_6 = arith.constant 0 : index
    %5 = vector.load %arg1[%c0_5, %c0_6] : memref<128x64xf32, #tpu.memory_space<vmem>>, vector<128x64xf32>
    %6 = arith.truncf %5 : vector<128x64xf32> to vector<128x64xbf16>
    %c0_7 = arith.constant 0 : index
    %c0_8 = arith.constant 0 : index
    %7 = vector.load %arg2[%c0_7, %c0_8] : memref<64x256xbf16, #tpu.memory_space<vmem>>, vector<64x256xbf16>
    %cst = arith.constant dense<0.000000e+00> : vector<128x256xf32>
    %8 = tpu.matmul %6, %7, %cst {dimension_numbers = #tpu.dot_dimension_numbers<[1], [0], [0], [1], [0, 0, 1, 1], [], []>} : vector<128x64xbf16>, vector<64x256xbf16>, vector<128x256xf32> -> vector<128x256xf32>
    %9 = vector.broadcast %0 : vector<1x256xf32> to vector<128x256xf32>
    %10 = arith.addf %8, %9 : vector<128x256xf32>
    %c0_9 = arith.constant 0 : index
    %c0_10 = arith.constant 0 : index
    %11 = vector.load %arg3[%c0_9, %c0_10] : memref<64x512xbf16, #tpu.memory_space<vmem>>, vector<64x512xbf16>
    %cst_11 = arith.constant dense<0.000000e+00> : vector<128x512xf32>
    %12 = tpu.matmul %6, %11, %cst_11 {dimension_numbers = #tpu.dot_dimension_numbers<[1], [0], [0], [1], [0, 0, 1, 1], [], []>} : vector<128x64xbf16>, vector<64x512xbf16>, vector<128x512xf32> -> vector<128x512xf32>
    %13 = vector.broadcast %1 : vector<1x512xf32> to vector<128x512xf32>
    %14 = arith.addf %12, %13 : vector<128x512xf32>
    %cst_12 = arith.constant 0.000000e+00 : f32
    %15 = vector.broadcast %cst_12 : f32 to vector<128x512xf32>
    %16 = arith.maximumf %14, %15 : vector<128x512xf32>
    %17 = arith.truncf %16 : vector<128x512xf32> to vector<128x512xbf16>
    %c0_13 = arith.constant 0 : index
    %c0_14 = arith.constant 0 : index
    %18 = vector.load %arg4[%c0_13, %c0_14] : memref<512x256xbf16, #tpu.memory_space<vmem>>, vector<512x256xbf16>
    %cst_15 = arith.constant dense<0.000000e+00> : vector<128x256xf32>
    %19 = tpu.matmul %17, %18, %cst_15 {dimension_numbers = #tpu.dot_dimension_numbers<[1], [0], [0], [1], [0, 0, 1, 1], [], []>} : vector<128x512xbf16>, vector<512x256xbf16>, vector<128x256xf32> -> vector<128x256xf32>
    %20 = vector.broadcast %2 : vector<1x256xf32> to vector<128x256xf32>
    %21 = arith.addf %19, %20 : vector<128x256xf32>
    %cst_16 = arith.constant 0.000000e+00 : f32
    %22 = vector.broadcast %cst_16 : f32 to vector<128x256xf32>
    %23 = arith.maximumf %21, %22 : vector<128x256xf32>
    %24 = arith.truncf %23 : vector<128x256xf32> to vector<128x256xbf16>
    %c0_17 = arith.constant 0 : index
    %c0_18 = arith.constant 0 : index
    %25 = vector.load %arg5[%c0_17, %c0_18] : memref<256x128xbf16, #tpu.memory_space<vmem>>, vector<256x128xbf16>
    %cst_19 = arith.constant dense<0.000000e+00> : vector<128x128xf32>
    %26 = tpu.matmul %24, %25, %cst_19 {dimension_numbers = #tpu.dot_dimension_numbers<[1], [0], [0], [1], [0, 0, 1, 1], [], []>} : vector<128x256xbf16>, vector<256x128xbf16>, vector<128x128xf32> -> vector<128x128xf32>
    %27 = vector.broadcast %3 : vector<1x128xf32> to vector<128x128xf32>
    %28 = arith.addf %26, %27 : vector<128x128xf32>
    %cst_20 = arith.constant 0.000000e+00 : f32
    %29 = vector.broadcast %cst_20 : f32 to vector<128x128xf32>
    %30 = arith.maximumf %28, %29 : vector<128x128xf32>
    %31 = arith.truncf %30 : vector<128x128xf32> to vector<128x128xbf16>
    %c0_21 = arith.constant 0 : index
    %c0_22 = arith.constant 0 : index
    %32 = vector.load %arg6[%c0_21, %c0_22] : memref<128x128xbf16, #tpu.memory_space<vmem>>, vector<128x128xbf16>
    %cst_23 = arith.constant dense<0.000000e+00> : vector<128x128xf32>
    %33 = tpu.matmul %31, %32, %cst_23 {dimension_numbers = #tpu.dot_dimension_numbers<[1], [0], [0], [1], [0, 0, 1, 1], [], []>} : vector<128x128xbf16>, vector<128x128xbf16>, vector<128x128xf32> -> vector<128x128xf32>
    %34 = vector.broadcast %4 : vector<1x128xf32> to vector<128x128xf32>
    %35 = arith.addf %33, %34 : vector<128x128xf32>
    %36 = tpu.concatenate %10, %35 in 1 : vector<128x256xf32>, vector<128x128xf32> -> vector<128x384xf32>
    %c0_24 = arith.constant 0 : index
    %c0_25 = arith.constant 0 : index
    %37 = vector.load %arg8[%c0_24, %c0_25] : memref<128x384xf32, #tpu.memory_space<vmem>>, vector<128x384xf32>
    tpu.vector_store %arg8[%c0_24, %c0_25], %36 {strides = array<i32>} : memref<128x384xf32, #tpu.memory_space<vmem>>, vector<128x384xf32>,
    return
  }
  func.func @transform_0(%arg0: i32) -> (i32, i32) {
    %c0_i32 = arith.constant 0 : i32
    %c0_i32_0 = arith.constant 0 : i32
    return %arg0, %c0_i32 : i32, i32
  }
  func.func @transform_1(%arg0: i32) -> (i32, i32) {
    %c0_i32 = arith.constant 0 : i32
    %c0_i32_0 = arith.constant 0 : i32
    %c0_i32_1 = arith.constant 0 : i32
    return %c0_i32, %c0_i32_0 : i32, i32
  }
  func.func @transform_2(%arg0: i32) -> (i32, i32) {
    %c0_i32 = arith.constant 0 : i32
    %c0_i32_0 = arith.constant 0 : i32
    %c0_i32_1 = arith.constant 0 : i32
    return %c0_i32, %c0_i32_0 : i32, i32
  }
  func.func @transform_3(%arg0: i32) -> (i32, i32) {
    %c0_i32 = arith.constant 0 : i32
    %c0_i32_0 = arith.constant 0 : i32
    %c0_i32_1 = arith.constant 0 : i32
    return %c0_i32, %c0_i32_0 : i32, i32
  }
  func.func @transform_4(%arg0: i32) -> (i32, i32) {
    %c0_i32 = arith.constant 0 : i32
    %c0_i32_0 = arith.constant 0 : i32
    %c0_i32_1 = arith.constant 0 : i32
    return %c0_i32, %c0_i32_0 : i32, i32
  }
  func.func @transform_5(%arg0: i32) -> (i32, i32) {
    %c0_i32 = arith.constant 0 : i32
    %c0_i32_0 = arith.constant 0 : i32
    %c0_i32_1 = arith.constant 0 : i32
    return %c0_i32, %c0_i32_0 : i32, i32
  }
  func.func @transform_6(%arg0: i32) -> (i32, i32) {
    %c0_i32 = arith.constant 0 : i32
    %c0_i32_0 = arith.constant 0 : i32
    %c0_i32_1 = arith.constant 0 : i32
    return %c0_i32, %c0_i32_0 : i32, i32
  }
  func.func @transform_7(%arg0: i32) -> (i32, i32) {
    %c0_i32 = arith.constant 0 : i32
    %c0_i32_0 = arith.constant 0 : i32
    return %arg0, %c0_i32 : i32, i32
  }
}

</mosaic_0001>

<llo_original>
// kernel: style_encoder_forward.1
$region0: #{style_encoder_forward.1}
  #allocation0 [shape = 'u32[]', space=smem, size = 0x4, offset = 0x4, fixed_abs, tag = 'smem constant byte address 0x4 - core index']
  #allocation1 [shape = 'u32[144,128]{1,0:T(1,128)}', space=vmem, size = 0x12000, scoped, tag = 'internal scratch']
  %s0 = inlined_call_operand.vmem [shape: f32[128,64], index: 0, kind: input, shape index: {}]
  %s1 = inlined_call_operand.hbm [shape: bf16[64,256], index: 1, kind: input, shape index: {}]
  %s2 = inlined_call_operand.vmem [shape: bf16[64,512], index: 2, kind: input, shape index: {}]
  %s3 = inlined_call_operand.hbm [shape: bf16[512,256], index: 3, kind: input, shape index: {}]
  %s4 = inlined_call_operand.hbm [shape: bf16[256,128], index: 4, kind: input, shape index: {}]
  %s5 = inlined_call_operand.hbm [shape: bf16[128,128], index: 5, kind: input, shape index: {}]
  %s6 = inlined_call_operand.vmem [shape: f32[1,1280], index: 6, kind: input, shape index: {}]
  %s7 = inlined_call_operand.vmem [shape: f32[128,384], index: 7, kind: output, shape index: {}]
  %s8 = sld [smem:[#allocation0]]
  $region54: #{style_encoder_forward.1} parent=0
    _
  %s10 = ssub.s32 1, %s8
  %s11 = scalar_select 0, %s10, %s8
  $region1: #{style_encoder_forward.1} parent=0
    #allocation2 [shape = 'u8[32768]{0}', space=vmem, size = 0x8000, scoped, tag = 'input window, operand 1, single buffered']
    #allocation3 [shape = 's32[1]{0}', space=sflag, size = 0x4, scoped, tag = 'scoped memory for style_encoder_forward.1']
    #allocation4 [shape = 'u8[262144]{0}', space=vmem, size = 0x40000, scoped, tag = 'input window, operand 3, single buffered']
    #allocation5 [shape = 's32[1]{0}', space=sflag, size = 0x4, scoped, tag = 'scoped memory for style_encoder_forward.1']
    #allocation6 [shape = 'u8[65536]{0}', space=vmem, size = 0x10000, scoped, tag = 'input window, operand 4, single buffered']
    #allocation7 [shape = 'u8[32768]{0}', space=vmem, size = 0x8000, scoped, tag = 'input window, operand 5, single buffered']
    #allocation8 [shape = 's32[1]{0}', space=sflag, size = 0x4, scoped, tag = 'scoped memory for style_encoder_forward.1']
    %12 = vsyncpa [#allocation3], 0
    %13 = vsyncpa [#allocation5], 0
    %14 = vsyncpa [#allocation8], 0
    // Predicated region
    $region2: #{style_encoder_forward.1} parent=1 // pred_check
      _
    $region3: #{style_encoder_forward.1} parent=1 // pred_check_branch
      %16 = sbr.rel (0) target = $region5
    $region4: #{style_encoder_forward.1} parent=1 // pred_region
      _
    $region5: #{style_encoder_forward.1} parent=1 // pred_fallthru
      _
    // Predicated region
    $region6: #{style_encoder_forward.1} parent=1 // pred_check
      _
    $region7: #{style_encoder_forward.1} parent=1 // pred_check_branch
      %18 = sbr.rel (0) target = $region9
    $region8: #{style_encoder_forward.1} parent=1 // pred_region
      %s20 = ssub.s32 1024, 1024
      %21 = vsyncadd [#allocation3], %s20
      %s22 = sshll.u32 [#allocation2], 4
      %s23 = int_to_ptr.vmem [resolvable:$true] %s22
      %28 = dma.hbm_to_vmem [thread:$0]  %s1, 1024, %s23, [#allocation3], 128, 128, 8
    $region9: #{style_encoder_forward.1} parent=1 // pred_fallthru
      _
    // Predicated region
    $region10: #{style_encoder_forward.1} parent=1 // pred_check
      _
    $region11: #{style_encoder_forward.1} parent=1 // pred_check_branch
      %30 = sbr.rel (0) target = $region13
    $region12: #{style_encoder_forward.1} parent=1 // pred_region
      _
    $region13: #{style_encoder_forward.1} parent=1 // pred_fallthru
      _
    // Predicated region
    $region14: #{style_encoder_forward.1} parent=1 // pred_check
      _
    $region15: #{style_encoder_forward.1} parent=1 // pred_check_branch
      %32 = sbr.rel (0) target = $region17
    $region16: #{style_encoder_forward.1} parent=1 // pred_region
      %s34 = ssub.s32 8192, 8192
      %35 = vsyncadd [#allocation5], %s34
      %s36 = sshll.u32 [#allocation4], 4
      %s37 = int_to_ptr.vmem [resolvable:$true] %s36
      %42 = dma.hbm_to_vmem [thread:$0]  %s3, 8192, %s37, [#allocation5], 128, 128, 8
    $region17: #{style_encoder_forward.1} parent=1 // pred_fallthru
      _
    // Predicated region
    $region18: #{style_encoder_forward.1} parent=1 // pred_check
      _
    $region19: #{style_encoder_forward.1} parent=1 // pred_check_branch
      %44 = sbr.rel (0) target = $region21
    $region20: #{style_encoder_forward.1} parent=1 // pred_region
      %s46 = ssub.s32 2048, 2048
      %47 = vsyncadd [#allocation5], %s46
      %s48 = sshll.u32 [#allocation6], 4
      %s49 = int_to_ptr.vmem [resolvable:$true] %s48
      %54 = dma.hbm_to_vmem [thread:$0]  %s4, 2048, %s49, [#allocation5], 64, 64, 4
    $region21: #{style_encoder_forward.1} parent=1 // pred_fallthru
      _
    // Predicated region
    $region22: #{style_encoder_forward.1} parent=1 // pred_check
      _
    $region23: #{style_encoder_forward.1} parent=1 // pred_check_branch
      %56 = sbr.rel (0) target = $region25
    $region24: #{style_encoder_forward.1} parent=1 // pred_region
      %s58 = ssub.s32 1024, 1024
      %59 = vsyncadd [#allocation8], %s58
      %s60 = sshll.u32 [#allocation7], 4
      %s61 = int_to_ptr.vmem [resolvable:$true] %s60
      %66 = dma.hbm_to_vmem [thread:$0]  %s5, 1024, %s61, [#allocation8], 64, 64, 4
    $region25: #{style_encoder_forward.1} parent=1 // pred_fallthru
      _
    // Predicated region
    $region26: #{style_encoder_forward.1} parent=1 // pred_check
      _
    $region27: #{style_encoder_forward.1} parent=1 // pred_check_branch
      %68 = sbr.rel (0) target = $region29
    $region28: #{style_encoder_forward.1} parent=1 // pred_region
      _
    $region29: #{style_encoder_forward.1} parent=1 // pred_fallthru
      _
    // Predicated region
    $region30: #{style_encoder_forward.1} parent=1 // pred_check
      _
    $region31: #{style_encoder_forward.1} parent=1 // pred_check_branch
      %70 = sbr.rel (0) target = $region33
    $region32: #{style_encoder_forward.1} parent=1 // pred_region
      %71 = dma.done [#allocation3], 1024
    $region33: #{style_encoder_forward.1} parent=1 // pred_fallthru
      _
    // Predicated region
    $region34: #{style_encoder_forward.1} parent=1 // pred_check
      _
    $region35: #{style_encoder_forward.1} parent=1 // pred_check_branch
      %73 = sbr.rel (0) target = $region37
    $region36: #{style_encoder_forward.1} parent=1 // pred_region
      %74 = dma.done [#allocation5], 8192
    $region37: #{style_encoder_forward.1} parent=1 // pred_fallthru
      _
    // Predicated region
    $region38: #{style_encoder_forward.1} parent=1 // pred_check
      _
    $region39: #{style_encoder_forward.1} parent=1 // pred_check_branch
      %76 = sbr.rel (0) target = $region41
    $region40: #{style_encoder_forward.1} parent=1 // pred_region
      %77 = dma.done [#allocation5], 2048
    $region41: #{style_encoder_forward.1} parent=1 // pred_fallthru
      _
    // Predicated region
    $region42: #{style_encoder_forward.1} parent=1 // pred_check
      _
    $region43: #{style_encoder_forward.1} parent=1 // pred_check_branch
      %79 = sbr.rel (0) target = $region45
    $region44: #{style_encoder_forward.1} parent=1 // pred_region
      %80 = dma.done [#allocation8], 1024
    $region45: #{style_encoder_forward.1} parent=1 // pred_fallthru
      _
    %v82 = vld [vmem:[%s6] sm:$0x3]
    %v83 = vld [vmem:[%s6 + $0x2] sm:$0xf]
    %v84 = vld [vmem:[%s6 + $0x6] sm:$0x3]
    %v85 = vld [vmem:[%s6 + $0x8] sm:$0x1]
    %v86 = vld [vmem:[%s6 + $0x9] sm:$0x1]
    %v87 = vld [vmem:[%s0] sm:$0xff]
    %v88 = vld [vmem:[%s0 + $0x8] sm:$0xff]
    %v89 = vld [vmem:[%s0 + $0x10] sm:$0xff]
    %v90 = vld [vmem:[%s0 + $0x18] sm:$0xff]
    %v91 = vld [vmem:[%s0 + $0x20] sm:$0xff]
    %v92 = vld [vmem:[%s0 + $0x28] sm:$0xff]
    %v93 = vld [vmem:[%s0 + $0x30] sm:$0xff]
    %v94 = vld [vmem:[%s0 + $0x38] sm:$0xff]
    %v95 = vld [vmem:[%s0 + $0x40] sm:$0xff]
    %v96 = vld [vmem:[%s0 + $0x48] sm:$0xff]
    %v97 = vld [vmem:[%s0 + $0x50] sm:$0xff]
    %v98 = vld [vmem:[%s0 + $0x58] sm:$0xff]
    %v99 = vld [vmem:[%s0 + $0x60] sm:$0xff]
    %v100 = vld [vmem:[%s0 + $0x68] sm:$0xff]
    %v101 = vld [vmem:[%s0 + $0x70] sm:$0xff]
    %v102 = vld [vmem:[%s0 + $0x78] sm:$0xff]
    %v103 = vpack.c.bf16 %v88, %v87
    %v104 = vpack.c.bf16 %v90, %v89
    %v105 = vpack.c.bf16 %v92, %v91
    %v106 = vpack.c.bf16 %v94, %v93
    %v107 = vpack.c.bf16 %v96, %v95
    %v108 = vpack.c.bf16 %v98, %v97
    %v109 = vpack.c.bf16 %v100, %v99
    %v110 = vpack.c.bf16 %v102, %v101
    %v111 = vld [vmem:[#allocation2] sm:$0xff]
    %v112 = vld [vmem:[#allocation2 + $0x8] sm:$0xff]
    %v113 = vld [vmem:[#allocation2 + $0x10] sm:$0xff]
    %v114 = vld [vmem:[#allocation2 + $0x18] sm:$0xff]
    %v115 = vld [vmem:[#allocation2 + $0x20] sm:$0xff]
    %v116 = vld [vmem:[#allocation2 + $0x28] sm:$0xff]
    %v117 = vld [vmem:[#allocation2 + $0x30] sm:$0xff]
    %v118 = vld [vmem:[#allocation2 + $0x38] sm:$0xff]
    %v120 = vlaneseq
    %v121 = vshrl.u32 %v120, 7
    %v122 = vsub.s32 0, %v121
    %v123 = vrot.slane %v82, %v122
    %v124 = vlaneseq
    %v125 = vshrl.u32 %v124, 7
    %v126 = vsub.s32 1, %v125
    %v127 = vrot.slane %v82, %v126
    %v138 = vunpack.c.l.b16 %v111
    %v139 = vunpack.c.h.b16 %v111
    %v140 = vunpack.c.l.b16 %v112
    %v141 = vunpack.c.h.b16 %v112
    %v142 = vunpack.c.l.b16 %v113
    %v143 = vunpack.c.h.b16 %v113
    %v144 = vunpack.c.l.b16 %v114
    %v145 = vunpack.c.h.b16 %v114
    %v146 = vunpack.c.l.b16 %v115
    %v147 = vunpack.c.h.b16 %v115
    %v148 = vunpack.c.l.b16 %v116
    %v149 = vunpack.c.h.b16 %v116
    %v150 = vunpack.c.l.b16 %v117
    %v151 = vunpack.c.h.b16 %v117
    %v152 = vunpack.c.l.b16 %v118
    %v153 = vunpack.c.h.b16 %v118
    %v154 = vpack.c.b16 %v140, %v138
    %v155 = vpack.c.b16 %v141, %v139
    %v156 = vpack.c.b16 %v144, %v142
    %v157 = vpack.c.b16 %v145, %v143
    %v158 = vpack.c.b16 %v148, %v146
    %v159 = vpack.c.b16 %v149, %v147
    %v160 = vpack.c.b16 %v152, %v150
    %v161 = vpack.c.b16 %v153, %v151
    %vm170 = vcmask 523264
    %v172 = vsel %vm170, %v103, 0
    %v175 = vsel %vm170, %v104, 0
    %v178 = vsel %vm170, %v105, 0
    %v181 = vsel %vm170, %v106, 0
    %v184 = vsel %vm170, %v107, 0
    %v187 = vsel %vm170, %v108, 0
    %v190 = vsel %vm170, %v109, 0
    %v193 = vsel %vm170, %v110, 0
    %195 = vmatprep.subr.bf16.mxu0 0
    %196 = vmatpush1.bf16.msra.mxu0 0
    %197 = vmatprep.subr.bf16.mxu0 0
    %198 = vmatpush1.bf16.msra.mxu0 0
    %199 = vmatprep.subr.bf16.mxu0 0
    %200 = vmatpush1.bf16.msra.mxu0 0
    %201 = vmatprep.subr.bf16.mxu0 0
    %202 = vmatpush1.bf16.msra.mxu0 0
    %203 = vmatprep.subr.bf16.mxu0 %v161
    %204 = vmatpush1.bf16.msra.mxu0 %v160
    %205 = vmatprep.subr.bf16.mxu0 %v159
    %206 = vmatpush1.bf16.msra.mxu0 %v158
    %207 = vmatprep.subr.bf16.mxu0 %v157
    %208 = vmatpush1.bf16.msra.mxu0 %v156
    %209 = vmatprep.subr.bf16.mxu0 %v155
    %210 = vmatpush1.bf16.msra.mxu0 %v154
    %211 = vmatprep.subr.bf16.mxu0 0
    %212 = vmatpush2.bf16.msra.mxu0 0
    %213 = vmatprep.subr.bf16.mxu0 0
    %214 = vmatpush2.bf16.msra.mxu0 0
    %215 = vmatprep.subr.bf16.mxu0 0
    %216 = vmatpush2.bf16.msra.mxu0 0
    %217 = vmatprep.subr.bf16.mxu0 0
    %218 = vmatpush2.bf16.msra.mxu0 0
    %219 = vmatprep.subr.bf16.mxu0 0
    %220 = vmatpush2.bf16.msra.mxu0 0
    %221 = vmatprep.subr.bf16.mxu0 0
    %222 = vmatpush2.bf16.msra.mxu0 0
    %223 = vmatprep.subr.bf16.mxu0 0
    %224 = vmatpush2.bf16.msra.mxu0 0
    %225 = vmatprep.subr.bf16.mxu0 0
    %226 = vmatpush2.bf16.msra.mxu0 0
    %227 = vmatprep.mubr.bf16.mxu0 0
    %228 = vmatmul.mubr.bf16.gmra.mxu0 %v172
    %v229 = vpop.f32.mrf.mxu0
    %v230 = vadd.f32 %v123, %v229
    %v231 = vpop.f32.mrf.mxu0
    %v232 = vadd.f32 %v127, %v231
    %v233 = vpop.f32.mrf.mxu0
    %v234 = vadd.f32 %v123, %v233
    %v235 = vpop.f32.mrf.mxu0
    %v236 = vadd.f32 %v127, %v235
    %237 = vmatprep.mubr.bf16.mxu0 0
    %238 = vmatmul.mubr.bf16.gmra.mxu0 %v175
    %v239 = vpop.f32.mrf.mxu0
    %v240 = vadd.f32 %v123, %v239
    %v241 = vpop.f32.mrf.mxu0
    %v242 = vadd.f32 %v127, %v241
    %v243 = vpop.f32.mrf.mxu0
    %v244 = vadd.f32 %v123, %v243
    %v245 = vpop.f32.mrf.mxu0
    %v246 = vadd.f32 %v127, %v245
    %247 = vmatprep.mubr.bf16.mxu0 0
    %248 = vmatmul.mubr.bf16.gmra.mxu0 %v178
    %v249 = vpop.f32.mrf.mxu0
    %v250 = vadd.f32 %v123, %v249
    %v251 = vpop.f32.mrf.mxu0
    %v252 = vadd.f32 %v127, %v251
    %v253 = vpop.f32.mrf.mxu0
    %v254 = vadd.f32 %v123, %v253
    %v255 = vpop.f32.mrf.mxu0
    %v256 = vadd.f32 %v127, %v255
    %257 = vmatprep.mubr.bf16.mxu0 0
    %258 = vmatmul.mubr.bf16.gmra.mxu0 %v181
    %v259 = vpop.f32.mrf.mxu0
    %v260 = vadd.f32 %v123, %v259
    %v261 = vpop.f32.mrf.mxu0
    %v262 = vadd.f32 %v127, %v261
    %v263 = vpop.f32.mrf.mxu0
    %v264 = vadd.f32 %v123, %v263
    %v265 = vpop.f32.mrf.mxu0
    %v266 = vadd.f32 %v127, %v265
    %267 = vmatprep.mubr.bf16.mxu0 0
    %268 = vmatmul.mubr.bf16.gmra.mxu0 %v184
    %v269 = vpop.f32.mrf.mxu0
    %v270 = vadd.f32 %v123, %v269
    %v271 = vpop.f32.mrf.mxu0
    %v272 = vadd.f32 %v127, %v271
    %v273 = vpop.f32.mrf.mxu0
    %v274 = vadd.f32 %v123, %v273
    %v275 = vpop.f32.mrf.mxu0
    %v276 = vadd.f32 %v127, %v275
    %277 = vmatprep.mubr.bf16.mxu0 0
    %278 = vmatmul.mubr.bf16.gmra.mxu0 %v187
    %v279 = vpop.f32.mrf.mxu0
    %v280 = vadd.f32 %v123, %v279
    %v281 = vpop.f32.mrf.mxu0
    %v282 = vadd.f32 %v127, %v281
    %v283 = vpop.f32.mrf.mxu0
    %v284 = vadd.f32 %v123, %v283
    %v285 = vpop.f32.mrf.mxu0
    %v286 = vadd.f32 %v127, %v285
    %287 = vmatprep.mubr.bf16.mxu0 0
    %288 = vmatmul.mubr.bf16.gmra.mxu0 %v190
    %v289 = vpop.f32.mrf.mxu0
    %v290 = vadd.f32 %v123, %v289
    %v291 = vpop.f32.mrf.mxu0
    %v292 = vadd.f32 %v127, %v291
    %v293 = vpop.f32.mrf.mxu0
    %v294 = vadd.f32 %v123, %v293
    %v295 = vpop.f32.mrf.mxu0
    %v296 = vadd.f32 %v127, %v295
    %297 = vmatprep.mubr.bf16.mxu0 0
    %298 = vmatmul.mubr.bf16.gmra.mxu0 %v193
    %v299 = vpop.f32.mrf.mxu0
    %v300 = vadd.f32 %v123, %v299
    %v301 = vpop.f32.mrf.mxu0
    %v302 = vadd.f32 %v127, %v301
    %v303 = vpop.f32.mrf.mxu0
    %v304 = vadd.f32 %v123, %v303
    %v305 = vpop.f32.mrf.mxu0
    %v306 = vadd.f32 %v127, %v305
    %307 = vdwg.mxu0
    %v308 = vld [vmem:[%s2] sm:$0xff]
    %v309 = vld [vmem:[%s2 + $0x8] sm:$0xff]
    %v310 = vld [vmem:[%s2 + $0x10] sm:$0xff]
    %v311 = vld [vmem:[%s2 + $0x18] sm:$0xff]
    %v312 = vld [vmem:[%s2 + $0x20] sm:$0xff]
    %v313 = vld [vmem:[%s2 + $0x28] sm:$0xff]
    %v314 = vld [vmem:[%s2 + $0x30] sm:$0xff]
    %v315 = vld [vmem:[%s2 + $0x38] sm:$0xff]
    %v316 = vld [vmem:[%s2 + $0x40] sm:$0xff]
    %v317 = vld [vmem:[%s2 + $0x48] sm:$0xff]
    %v318 = vld [vmem:[%s2 + $0x50] sm:$0xff]
    %v319 = vld [vmem:[%s2 + $0x58] sm:$0xff]
    %v320 = vld [vmem:[%s2 + $0x60] sm:$0xff]
    %v321 = vld [vmem:[%s2 + $0x68] sm:$0xff]
    %v322 = vld [vmem:[%s2 + $0x70] sm:$0xff]
    %v323 = vld [vmem:[%s2 + $0x78] sm:$0xff]
    %v325 = vlaneseq
    %v326 = vshrl.u32 %v325, 7
    %v327 = vsub.s32 0, %v326
    %v328 = vrot.slane %v83, %v327
    %v329 = vlaneseq
    %v330 = vshrl.u32 %v329, 7
    %v331 = vsub.s32 1, %v330
    %v332 = vrot.slane %v83, %v331
    %v333 = vlaneseq
    %v334 = vshrl.u32 %v333, 7
    %v335 = vsub.s32 2, %v334
    %v336 = vrot.slane %v83, %v335
    %v337 = vlaneseq
    %v338 = vshrl.u32 %v337, 7
    %v339 = vsub.s32 3, %v338
    %v340 = vrot.slane %v83, %v339
    %v361 = vunpack.c.l.b16 %v308
    %v362 = vunpack.c.h.b16 %v308
    %v363 = vunpack.c.l.b16 %v309
    %v364 = vunpack.c.h.b16 %v309
    %v365 = vunpack.c.l.b16 %v310
    %v366 = vunpack.c.h.b16 %v310
    %v367 = vunpack.c.l.b16 %v311
    %v368 = vunpack.c.h.b16 %v311
    %v369 = vunpack.c.l.b16 %v312
    %v370 = vunpack.c.h.b16 %v312
    %v371 = vunpack.c.l.b16 %v313
    %v372 = vunpack.c.h.b16 %v313
    %v373 = vunpack.c.l.b16 %v314
    %v374 = vunpack.c.h.b16 %v314
    %v375 = vunpack.c.l.b16 %v315
    %v376 = vunpack.c.h.b16 %v315
    %v377 = vunpack.c.l.b16 %v316
    %v378 = vunpack.c.h.b16 %v316
    %v379 = vunpack.c.l.b16 %v317
    %v380 = vunpack.c.h.b16 %v317
    %v381 = vunpack.c.l.b16 %v318
    %v382 = vunpack.c.h.b16 %v318
    %v383 = vunpack.c.l.b16 %v319
    %v384 = vunpack.c.h.b16 %v319
    %v385 = vunpack.c.l.b16 %v320
    %v386 = vunpack.c.h.b16 %v320
    %v387 = vunpack.c.l.b16 %v321
    %v388 = vunpack.c.h.b16 %v321
    %v389 = vunpack.c.l.b16 %v322
    %v390 = vunpack.c.h.b16 %v322
    %v391 = vunpack.c.l.b16 %v323
    %v392 = vunpack.c.h.b16 %v323
    %v393 = vpack.c.b16 %v365, %v361
    %v394 = vpack.c.b16 %v366, %v362
    %v395 = vpack.c.b16 %v367, %v363
    %v396 = vpack.c.b16 %v368, %v364
    %v397 = vpack.c.b16 %v373, %v369
    %v398 = vpack.c.b16 %v374, %v370
    %v399 = vpack.c.b16 %v375, %v371
    %v400 = vpack.c.b16 %v376, %v372
    %v401 = vpack.c.b16 %v381, %v377
    %v402 = vpack.c.b16 %v382, %v378
    %v403 = vpack.c.b16 %v383, %v379
    %v404 = vpack.c.b16 %v384, %v380
    %v405 = vpack.c.b16 %v389, %v385
    %v406 = vpack.c.b16 %v390, %v386
    %v407 = vpack.c.b16 %v391, %v387
    %v408 = vpack.c.b16 %v392, %v388
    %425 = vmatprep.subr.bf16.mxu0 0
    %426 = vmatpush1.bf16.msra.mxu0 0
    %427 = vmatprep.subr.bf16.mxu0 0
    %428 = vmatpush1.bf16.msra.mxu0 0
    %429 = vmatprep.subr.bf16.mxu0 0
    %430 = vmatpush1.bf16.msra.mxu0 0
    %431 = vmatprep.subr.bf16.mxu0 0
    %432 = vmatpush1.bf16.msra.mxu0 0
    %433 = vmatprep.subr.bf16.mxu0 %v406
    %434 = vmatpush1.bf16.msra.mxu0 %v405
    %435 = vmatprep.subr.bf16.mxu0 %v402
    %436 = vmatpush1.bf16.msra.mxu0 %v401
    %437 = vmatprep.subr.bf16.mxu0 %v398
    %438 = vmatpush1.bf16.msra.mxu0 %v397
    %439 = vmatprep.subr.bf16.mxu0 %v394
    %440 = vmatpush1.bf16.msra.mxu0 %v393
    %441 = vmatprep.subr.bf16.mxu0 0
    %442 = vmatpush2.bf16.msra.mxu0 0
    %443 = vmatprep.subr.bf16.mxu0 0
    %444 = vmatpush2.bf16.msra.mxu0 0
    %445 = vmatprep.subr.bf16.mxu0 0
    %446 = vmatpush2.bf16.msra.mxu0 0
    %447 = vmatprep.subr.bf16.mxu0 0
    %448 = vmatpush2.bf16.msra.mxu0 0
    %449 = vmatprep.subr.bf16.mxu0 0
    %450 = vmatpush2.bf16.msra.mxu0 0
    %451 = vmatprep.subr.bf16.mxu0 0
    %452 = vmatpush2.bf16.msra.mxu0 0
    %453 = vmatprep.subr.bf16.mxu0 0
    %454 = vmatpush2.bf16.msra.mxu0 0
    %455 = vmatprep.subr.bf16.mxu0 0
    %456 = vmatpush2.bf16.msra.mxu0 0
    %457 = vmatprep.mubr.bf16.mxu0 0
    %458 = vmatmul.mubr.bf16.gmra.mxu0 %v172
    %v459 = vpop.f32.mrf.mxu0
    %v460 = vadd.f32 %v328, %v459
    %v461 = vpop.f32.mrf.mxu0
    %v462 = vadd.f32 %v332, %v461
    %v463 = vpop.f32.mrf.mxu0
    %v464 = vadd.f32 %v328, %v463
    %v465 = vpop.f32.mrf.mxu0
    %v466 = vadd.f32 %v332, %v465
    %467 = vmatprep.mubr.bf16.mxu0 0
    %468 = vmatmul.mubr.bf16.gmra.mxu0 %v175
    %v469 = vpop.f32.mrf.mxu0
    %v470 = vadd.f32 %v328, %v469
    %v471 = vpop.f32.mrf.mxu0
    %v472 = vadd.f32 %v332, %v471
    %v473 = vpop.f32.mrf.mxu0
    %v474 = vadd.f32 %v328, %v473
    %v475 = vpop.f32.mrf.mxu0
    %v476 = vadd.f32 %v332, %v475
    %477 = vmatprep.mubr.bf16.mxu0 0
    %478 = vmatmul.mubr.bf16.gmra.mxu0 %v178
    %v479 = vpop.f32.mrf.mxu0
    %v480 = vadd.f32 %v328, %v479
    %v481 = vpop.f32.mrf.mxu0
    %v482 = vadd.f32 %v332, %v481
    %v483 = vpop.f32.mrf.mxu0
    %v484 = vadd.f32 %v328, %v483
    %v485 = vpop.f32.mrf.mxu0
    %v486 = vadd.f32 %v332, %v485
    %487 = vmatprep.mubr.bf16.mxu0 0
    %488 = vmatmul.mubr.bf16.gmra.mxu0 %v181
    %v489 = vpop.f32.mrf.mxu0
    %v490 = vadd.f32 %v328, %v489
    %v491 = vpop.f32.mrf.mxu0
    %v492 = vadd.f32 %v332, %v491
    %v493 = vpop.f32.mrf.mxu0
    %v494 = vadd.f32 %v328, %v493
    %v495 = vpop.f32.mrf.mxu0
    %v496 = vadd.f32 %v332, %v495
    %497 = vmatprep.mubr.bf16.mxu0 0
    %498 = vmatmul.mubr.bf16.gmra.mxu0 %v184
    %v499 = vpop.f32.mrf.mxu0
    %v500 = vadd.f32 %v328, %v499
    %v501 = vpop.f32.mrf.mxu0
    %v502 = vadd.f32 %v332, %v501
    %v503 = vpop.f32.mrf.mxu0
    %v504 = vadd.f32 %v328, %v503
    %v505 = vpop.f32.mrf.mxu0
    %v506 = vadd.f32 %v332, %v505
    %507 = vmatprep.mubr.bf16.mxu0 0
    %508 = vmatmul.mubr.bf16.gmra.mxu0 %v187
    %v509 = vpop.f32.mrf.mxu0
    %v510 = vadd.f32 %v328, %v509
    %v511 = vpop.f32.mrf.mxu0
    %v512 = vadd.f32 %v332, %v511
    %v513 = vpop.f32.mrf.mxu0
    %v514 = vadd.f32 %v328, %v513
    %v515 = vpop.f32.mrf.mxu0
    %v516 = vadd.f32 %v332, %v515
    %517 = vmatprep.mubr.bf16.mxu0 0
    %518 = vmatmul.mubr.bf16.gmra.mxu0 %v190
    %v519 = vpop.f32.mrf.mxu0
    %v520 = vadd.f32 %v328, %v519
    %v521 = vpop.f32.mrf.mxu0
    %v522 = vadd.f32 %v332, %v521
    %v523 = vpop.f32.mrf.mxu0
    %v524 = vadd.f32 %v328, %v523
    %v525 = vpop.f32.mrf.mxu0
    %v526 = vadd.f32 %v332, %v525
    %527 = vmatprep.mubr.bf16.mxu0 0
    %528 = vmatmul.mubr.bf16.gmra.mxu0 %v193
    %v529 = vpop.f32.mrf.mxu0
    %v530 = vadd.f32 %v328, %v529
    %v531 = vpop.f32.mrf.mxu0
    %v532 = vadd.f32 %v332, %v531
    %v533 = vpop.f32.mrf.mxu0
    %v534 = vadd.f32 %v328, %v533
    %v535 = vpop.f32.mrf.mxu0
    %v536 = vadd.f32 %v332, %v535
    %537 = vdwg.mxu0
    %538 = vmatprep.subr.bf16.mxu0 0
    %539 = vmatpush1.bf16.msra.mxu0 0
    %540 = vmatprep.subr.bf16.mxu0 0
    %541 = vmatpush1.bf16.msra.mxu0 0
    %542 = vmatprep.subr.bf16.mxu0 0
    %543 = vmatpush1.bf16.msra.mxu0 0
    %544 = vmatprep.subr.bf16.mxu0 0
    %545 = vmatpush1.bf16.msra.mxu0 0
    %546 = vmatprep.subr.bf16.mxu0 %v408
    %547 = vmatpush1.bf16.msra.mxu0 %v407
    %548 = vmatprep.subr.bf16.mxu0 %v404
    %549 = vmatpush1.bf16.msra.mxu0 %v403
    %550 = vmatprep.subr.bf16.mxu0 %v400
    %551 = vmatpush1.bf16.msra.mxu0 %v399
    %552 = vmatprep.subr.bf16.mxu0 %v396
    %553 = vmatpush1.bf16.msra.mxu0 %v395
    %554 = vmatprep.subr.bf16.mxu0 0
    %555 = vmatpush2.bf16.msra.mxu0 0
    %556 = vmatprep.subr.bf16.mxu0 0
    %557 = vmatpush2.bf16.msra.mxu0 0
    %558 = vmatprep.subr.bf16.mxu0 0
    %559 = vmatpush2.bf16.msra.mxu0 0
    %560 = vmatprep.subr.bf16.mxu0 0
    %561 = vmatpush2.bf16.msra.mxu0 0
    %562 = vmatprep.subr.bf16.mxu0 0
    %563 = vmatpush2.bf16.msra.mxu0 0
    %564 = vmatprep.subr.bf16.mxu0 0
    %565 = vmatpush2.bf16.msra.mxu0 0
    %566 = vmatprep.subr.bf16.mxu0 0
    %567 = vmatpush2.bf16.msra.mxu0 0
    %568 = vmatprep.subr.bf16.mxu0 0
    %569 = vmatpush2.bf16.msra.mxu0 0
    %570 = vmatprep.mubr.bf16.mxu0 0
    %571 = vmatmul.mubr.bf16.gmra.mxu0 %v172
    %v572 = vpop.f32.mrf.mxu0
    %v573 = vadd.f32 %v336, %v572
    %v574 = vpop.f32.mrf.mxu0
    %v575 = vadd.f32 %v340, %v574
    %v576 = vpop.f32.mrf.mxu0
    %v577 = vadd.f32 %v336, %v576
    %v578 = vpop.f32.mrf.mxu0
    %v579 = vadd.f32 %v340, %v578
    %580 = vmatprep.mubr.bf16.mxu0 0
    %581 = vmatmul.mubr.bf16.gmra.mxu0 %v175
    %v582 = vpop.f32.mrf.mxu0
    %v583 = vadd.f32 %v336, %v582
    %v584 = vpop.f32.mrf.mxu0
    %v585 = vadd.f32 %v340, %v584
    %v586 = vpop.f32.mrf.mxu0
    %v587 = vadd.f32 %v336, %v586
    %v588 = vpop.f32.mrf.mxu0
    %v589 = vadd.f32 %v340, %v588
    %590 = vmatprep.mubr.bf16.mxu0 0
    %591 = vmatmul.mubr.bf16.gmra.mxu0 %v178
    %v592 = vpop.f32.mrf.mxu0
    %v593 = vadd.f32 %v336, %v592
    %v594 = vpop.f32.mrf.mxu0
    %v595 = vadd.f32 %v340, %v594
    %v596 = vpop.f32.mrf.mxu0
    %v597 = vadd.f32 %v336, %v596
    %v598 = vpop.f32.mrf.mxu0
    %v599 = vadd.f32 %v340, %v598
    %600 = vmatprep.mubr.bf16.mxu0 0
    %601 = vmatmul.mubr.bf16.gmra.mxu0 %v181
    %v602 = vpop.f32.mrf.mxu0
    %v603 = vadd.f32 %v336, %v602
    %v604 = vpop.f32.mrf.mxu0
    %v605 = vadd.f32 %v340, %v604
    %v606 = vpop.f32.mrf.mxu0
    %v607 = vadd.f32 %v336, %v606
    %v608 = vpop.f32.mrf.mxu0
    %v609 = vadd.f32 %v340, %v608
    %610 = vmatprep.mubr.bf16.mxu0 0
    %611 = vmatmul.mubr.bf16.gmra.mxu0 %v184
    %v612 = vpop.f32.mrf.mxu0
    %v613 = vadd.f32 %v336, %v612
    %v614 = vpop.f32.mrf.mxu0
    %v615 = vadd.f32 %v340, %v614
    %v616 = vpop.f32.mrf.mxu0
    %v617 = vadd.f32 %v336, %v616
    %v618 = vpop.f32.mrf.mxu0
    %v619 = vadd.f32 %v340, %v618
    %620 = vmatprep.mubr.bf16.mxu0 0
    %621 = vmatmul.mubr.bf16.gmra.mxu0 %v187
    %v622 = vpop.f32.mrf.mxu0
    %v623 = vadd.f32 %v336, %v622
    %v624 = vpop.f32.mrf.mxu0
    %v625 = vadd.f32 %v340, %v624
    %v626 = vpop.f32.mrf.mxu0
    %v627 = vadd.f32 %v336, %v626
    %v628 = vpop.f32.mrf.mxu0
    %v629 = vadd.f32 %v340, %v628
    %630 = vmatprep.mubr.bf16.mxu0 0
    %631 = vmatmul.mubr.bf16.gmra.mxu0 %v190
    %v632 = vpop.f32.mrf.mxu0
    %v633 = vadd.f32 %v336, %v632
    %v634 = vpop.f32.mrf.mxu0
    %v635 = vadd.f32 %v340, %v634
    %v636 = vpop.f32.mrf.mxu0
    %v637 = vadd.f32 %v336, %v636
    %v638 = vpop.f32.mrf.mxu0
    %v639 = vadd.f32 %v340, %v638
    %640 = vmatprep.mubr.bf16.mxu0 0
    %641 = vmatmul.mubr.bf16.gmra.mxu0 %v193
    %v642 = vpop.f32.mrf.mxu0
    %v643 = vadd.f32 %v336, %v642
    %v644 = vpop.f32.mrf.mxu0
    %v645 = vadd.f32 %v340, %v644
    %v646 = vpop.f32.mrf.mxu0
    %v647 = vadd.f32 %v336, %v646
    %v648 = vpop.f32.mrf.mxu0
    %v649 = vadd.f32 %v340, %v648
    %650 = vdwg.mxu0
    %v651 = vmax.f32 %v460, 0.0
    %v652 = vmax.f32 %v462, 0.0
    %v653 = vmax.f32 %v573, 0.0
    %v654 = vmax.f32 %v575, 0.0
    %v655 = vmax.f32 %v464, 0.0
    %v656 = vmax.f32 %v466, 0.0
    %v657 = vmax.f32 %v577, 0.0
    %v658 = vmax.f32 %v579, 0.0
    %v659 = vmax.f32 %v470, 0.0
    %v660 = vmax.f32 %v472, 0.0
    %v661 = vmax.f32 %v583, 0.0
    %v662 = vmax.f32 %v585, 0.0
    %v663 = vmax.f32 %v474, 0.0
    %v664 = vmax.f32 %v476, 0.0
    %v665 = vmax.f32 %v587, 0.0
    %v666 = vmax.f32 %v589, 0.0
    %v667 = vmax.f32 %v480, 0.0
    %v668 = vmax.f32 %v482, 0.0
    %v669 = vmax.f32 %v593, 0.0
    %v670 = vmax.f32 %v595, 0.0
    %v671 = vmax.f32 %v484, 0.0
    %v672 = vmax.f32 %v486, 0.0
    %v673 = vmax.f32 %v597, 0.0
    %v674 = vmax.f32 %v599, 0.0
    %v675 = vmax.f32 %v490, 0.0
    %v676 = vmax.f32 %v492, 0.0
    %v677 = vmax.f32 %v603, 0.0
    %v678 = vmax.f32 %v605, 0.0
    %v679 = vmax.f32 %v494, 0.0
    %v680 = vmax.f32 %v496, 0.0
    %v681 = vmax.f32 %v607, 0.0
    %v682 = vmax.f32 %v609, 0.0
    %v683 = vmax.f32 %v500, 0.0
    %v684 = vmax.f32 %v502, 0.0
    %v685 = vmax.f32 %v613, 0.0
    %v686 = vmax.f32 %v615, 0.0
    %v687 = vmax.f32 %v504, 0.0
    %v688 = vmax.f32 %v506, 0.0
    %v689 = vmax.f32 %v617, 0.0
    %v690 = vmax.f32 %v619, 0.0
    %v691 = vmax.f32 %v510, 0.0
    %v692 = vmax.f32 %v512, 0.0
    %v693 = vmax.f32 %v623, 0.0
    %v694 = vmax.f32 %v625, 0.0
    %v695 = vmax.f32 %v514, 0.0
    %v696 = vmax.f32 %v516, 0.0
    %v697 = vmax.f32 %v627, 0.0
    %v698 = vmax.f32 %v629, 0.0
    %v699 = vmax.f32 %v520, 0.0
    %v700 = vmax.f32 %v522, 0.0
    %v701 = vmax.f32 %v633, 0.0
    %v702 = vmax.f32 %v635, 0.0
    %v703 = vmax.f32 %v524, 0.0
    %v704 = vmax.f32 %v526, 0.0
    %v705 = vmax.f32 %v637, 0.0
    %v706 = vmax.f32 %v639, 0.0
    %v707 = vmax.f32 %v530, 0.0
    %v708 = vmax.f32 %v532, 0.0
    %v709 = vmax.f32 %v643, 0.0
    %v710 = vmax.f32 %v645, 0.0
    %v711 = vmax.f32 %v534, 0.0
    %v712 = vmax.f32 %v536, 0.0
    %v713 = vmax.f32 %v647, 0.0
    %v714 = vmax.f32 %v649, 0.0
    %v715 = vpack.c.bf16 %v655, %v651
    %v716 = vpack.c.bf16 %v656, %v652
    %v717 = vpack.c.bf16 %v657, %v653
    %v718 = vpack.c.bf16 %v658, %v654
    %v719 = vpack.c.bf16 %v663, %v659
    %v720 = vpack.c.bf16 %v664, %v660
    %v721 = vpack.c.bf16 %v665, %v661
    %v722 = vpack.c.bf16 %v666, %v662
    %v723 = vpack.c.bf16 %v671, %v667
    %v724 = vpack.c.bf16 %v672, %v668
    %v725 = vpack.c.bf16 %v673, %v669
    %v726 = vpack.c.bf16 %v674, %v670
    %v727 = vpack.c.bf16 %v679, %v675
    %v728 = vpack.c.bf16 %v680, %v676
    %v729 = vpack.c.bf16 %v681, %v677
    %v730 = vpack.c.bf16 %v682, %v678
    %v731 = vpack.c.bf16 %v687, %v683
    %v732 = vpack.c.bf16 %v688, %v684
    %v733 = vpack.c.bf16 %v689, %v685
    %v734 = vpack.c.bf16 %v690, %v686
    %v735 = vpack.c.bf16 %v695, %v691
    %v736 = vpack.c.bf16 %v696, %v692
    %v737 = vpack.c.bf16 %v697, %v693
    %v738 = vpack.c.bf16 %v698, %v694
    %v739 = vpack.c.bf16 %v703, %v699
    %v740 = vpack.c.bf16 %v704, %v700
    %v741 = vpack.c.bf16 %v705, %v701
    %v742 = vpack.c.bf16 %v706, %v702
    %v743 = vpack.c.bf16 %v711, %v707
    %v744 = vpack.c.bf16 %v712, %v708
    %v745 = vpack.c.bf16 %v713, %v709
    %v746 = vpack.c.bf16 %v714, %v710
    %v747 = vld [vmem:[#allocation4] sm:$0xff]
    %v748 = vld [vmem:[#allocation4 + $0x8] sm:$0xff]
    %v749 = vld [vmem:[#allocation4 + $0x10] sm:$0xff]
    %v750 = vld [vmem:[#allocation4 + $0x18] sm:$0xff]
    %v751 = vld [vmem:[#allocation4 + $0x20] sm:$0xff]
    %v752 = vld [vmem:[#allocation4 + $0x28] sm:$0xff]
    %v753 = vld [vmem:[#allocation4 + $0x30] sm:$0xff]
    %v754 = vld [vmem:[#allocation4 + $0x38] sm:$0xff]
    %v755 = vld [vmem:[#allocation4 + $0x40] sm:$0xff]
    %v756 = vld [vmem:[#allocation4 + $0x48] sm:$0xff]
    %v757 = vld [vmem:[#allocation4 + $0x50] sm:$0xff]
    %v758 = vld [vmem:[#allocation4 + $0x58] sm:$0xff]
    %v759 = vld [vmem:[#allocation4 + $0x60] sm:$0xff]
    %v760 = vld [vmem:[#allocation4 + $0x68] sm:$0xff]
    %v761 = vld [vmem:[#allocation4 + $0x70] sm:$0xff]
    %v762 = vld [vmem:[#allocation4 + $0x78] sm:$0xff]
    %v763 = vld [vmem:[#allocation4 + $0x80] sm:$0xff]
    %v764 = vld [vmem:[#allocation4 + $0x88] sm:$0xff]
    %v765 = vld [vmem:[#allocation4 + $0x90] sm:$0xff]
    %v766 = vld [vmem:[#allocation4 + $0x98] sm:$0xff]
    %v767 = vld [vmem:[#allocation4 + $0xa0] sm:$0xff]
    %v768 = vld [vmem:[#allocation4 + $0xa8] sm:$0xff]
    %v769 = vld [vmem:[#allocation4 + $0xb0] sm:$0xff]
    %v770 = vld [vmem:[#allocation4 + $0xb8] sm:$0xff]
    %v771 = vld [vmem:[#allocation4 + $0xc0] sm:$0xff]
    %v772 = vld [vmem:[#allocation4 + $0xc8] sm:$0xff]
    %v773 = vld [vmem:[#allocation4 + $0xd0] sm:$0xff]
    %v774 = vld [vmem:[#allocation4 + $0xd8] sm:$0xff]
    %v775 = vld [vmem:[#allocation4 + $0xe0] sm:$0xff]
    %v776 = vld [vmem:[#allocation4 + $0xe8] sm:$0xff]
    %v777 = vld [vmem:[#allocation4 + $0xf0] sm:$0xff]
    %v778 = vld [vmem:[#allocation4 + $0xf8] sm:$0xff]
    %v779 = vld [vmem:[#allocation4 + $0x100] sm:$0xff]
    %v780 = vld [vmem:[#allocation4 + $0x108] sm:$0xff]
    %v781 = vld [vmem:[#allocation4 + $0x110] sm:$0xff]
    %v782 = vld [vmem:[#allocation4 + $0x118] sm:$0xff]
    %v783 = vld [vmem:[#allocation4 + $0x120] sm:$0xff]
    %v784 = vld [vmem:[#allocation4 + $0x128] sm:$0xff]
    %v785 = vld [vmem:[#allocation4 + $0x130] sm:$0xff]
    %v786 = vld [vmem:[#allocation4 + $0x138] sm:$0xff]
    %v787 = vld [vmem:[#allocation4 + $0x140] sm:$0xff]
    %v788 = vld [vmem:[#allocation4 + $0x148] sm:$0xff]
    %v789 = vld [vmem:[#allocation4 + $0x150] sm:$0xff]
    %v790 = vld [vmem:[#allocation4 + $0x158] sm:$0xff]
    %v791 = vld [vmem:[#allocation4 + $0x160] sm:$0xff]
    %v792 = vld [vmem:[#allocation4 + $0x168] sm:$0xff]
    %v793 = vld [vmem:[#allocation4 + $0x170] sm:$0xff]
    %v794 = vld [vmem:[#allocation4 + $0x178] sm:$0xff]
    %v795 = vld [vmem:[#allocation4 + $0x180] sm:$0xff]
    %v796 = vld [vmem:[#allocation4 + $0x188] sm:$0xff]
    %v797 = vld [vmem:[#allocation4 + $0x190] sm:$0xff]
    %v798 = vld [vmem:[#allocation4 + $0x198] sm:$0xff]
    %v799 = vld [vmem:[#allocation4 + $0x1a0] sm:$0xff]
    %v800 = vld [vmem:[#allocation4 + $0x1a8] sm:$0xff]
    %v801 = vld [vmem:[#allocation4 + $0x1b0] sm:$0xff]
    %v802 = vld [vmem:[#allocation4 + $0x1b8] sm:$0xff]
    %v803 = vld [vmem:[#allocation4 + $0x1c0] sm:$0xff]
    %v804 = vld [vmem:[#allocation4 + $0x1c8] sm:$0xff]
    %v805 = vld [vmem:[#allocation4 + $0x1d0] sm:$0xff]
    %v806 = vld [vmem:[#allocation4 + $0x1d8] sm:$0xff]
    %v807 = vld [vmem:[#allocation4 + $0x1e0] sm:$0xff]
    %v808 = vld [vmem:[#allocation4 + $0x1e8] sm:$0xff]
    %v809 = vld [vmem:[#allocation4 + $0x1f0] sm:$0xff]
    %v810 = vld [vmem:[#allocation4 + $0x1f8] sm:$0xff]
    %v812 = vlaneseq
    %v813 = vshrl.u32 %v812, 7
    %v814 = vsub.s32 0, %v813
    %v815 = vrot.slane %v84, %v814
    %v816 = vlaneseq
    %v817 = vshrl.u32 %v816, 7
    %v818 = vsub.s32 1, %v817
    %v819 = vrot.slane %v84, %v818
    %v886 = vunpack.c.l.b16 %v747
    %v887 = vunpack.c.h.b16 %v747
    %v888 = vunpack.c.l.b16 %v748
    %v889 = vunpack.c.h.b16 %v748
    %v890 = vunpack.c.l.b16 %v749
    %v891 = vunpack.c.h.b16 %v749
    %v892 = vunpack.c.l.b16 %v750
    %v893 = vunpack.c.h.b16 %v750
    %v894 = vunpack.c.l.b16 %v751
    %v895 = vunpack.c.h.b16 %v751
    %v896 = vunpack.c.l.b16 %v752
    %v897 = vunpack.c.h.b16 %v752
    %v898 = vunpack.c.l.b16 %v753
    %v899 = vunpack.c.h.b16 %v753
    %v900 = vunpack.c.l.b16 %v754
    %v901 = vunpack.c.h.b16 %v754
    %v902 = vunpack.c.l.b16 %v755
    %v903 = vunpack.c.h.b16 %v755
    %v904 = vunpack.c.l.b16 %v756
    %v905 = vunpack.c.h.b16 %v756
    %v906 = vunpack.c.l.b16 %v757
    %v907 = vunpack.c.h.b16 %v757
    %v908 = vunpack.c.l.b16 %v758
    %v909 = vunpack.c.h.b16 %v758
    %v910 = vunpack.c.l.b16 %v759
    %v911 = vunpack.c.h.b16 %v759
    %v912 = vunpack.c.l.b16 %v760
    %v913 = vunpack.c.h.b16 %v760
    %v914 = vunpack.c.l.b16 %v761
    %v915 = vunpack.c.h.b16 %v761
    %v916 = vunpack.c.l.b16 %v762
    %v917 = vunpack.c.h.b16 %v762
    %v918 = vunpack.c.l.b16 %v763
    %v919 = vunpack.c.h.b16 %v763
    %v920 = vunpack.c.l.b16 %v764
    %v921 = vunpack.c.h.b16 %v764
    %v922 = vunpack.c.l.b16 %v765
    %v923 = vunpack.c.h.b16 %v765
    %v924 = vunpack.c.l.b16 %v766
    %v925 = vunpack.c.h.b16 %v766
    %v926 = vunpack.c.l.b16 %v767
    %v927 = vunpack.c.h.b16 %v767
    %v928 = vunpack.c.l.b16 %v768
    %v929 = vunpack.c.h.b16 %v768
    %v930 = vunpack.c.l.b16 %v769
    %v931 = vunpack.c.h.b16 %v769
    %v932 = vunpack.c.l.b16 %v770
    %v933 = vunpack.c.h.b16 %v770
    %v934 = vunpack.c.l.b16 %v771
    %v935 = vunpack.c.h.b16 %v771
    %v936 = vunpack.c.l.b16 %v772
    %v937 = vunpack.c.h.b16 %v772
    %v938 = vunpack.c.l.b16 %v773
    %v939 = vunpack.c.h.b16 %v773
    %v940 = vunpack.c.l.b16 %v774
    %v941 = vunpack.c.h.b16 %v774
    %v942 = vunpack.c.l.b16 %v775
    %v943 = vunpack.c.h.b16 %v775
    %v944 = vunpack.c.l.b16 %v776
    %v945 = vunpack.c.h.b16 %v776
    %v946 = vunpack.c.l.b16 %v777
    %v947 = vunpack.c.h.b16 %v777
    %v948 = vunpack.c.l.b16 %v778
    %v949 = vunpack.c.h.b16 %v778
    %v950 = vunpack.c.l.b16 %v779
    %v951 = vunpack.c.h.b16 %v779
    %v952 = vunpack.c.l.b16 %v780
    %v953 = vunpack.c.h.b16 %v780
    %v954 = vunpack.c.l.b16 %v781
    %v955 = vunpack.c.h.b16 %v781
    %v956 = vunpack.c.l.b16 %v782
    %v957 = vunpack.c.h.b16 %v782
    %v958 = vunpack.c.l.b16 %v783
    %v959 = vunpack.c.h.b16 %v783
    %v960 = vunpack.c.l.b16 %v784
    %v961 = vunpack.c.h.b16 %v784
    %v962 = vunpack.c.l.b16 %v785
    %v963 = vunpack.c.h.b16 %v785
    %v964 = vunpack.c.l.b16 %v786
    %v965 = vunpack.c.h.b16 %v786
    %v966 = vunpack.c.l.b16 %v787
    %v967 = vunpack.c.h.b16 %v787
    %v968 = vunpack.c.l.b16 %v788
    %v969 = vunpack.c.h.b16 %v788
    %v970 = vunpack.c.l.b16 %v789
    %v971 = vunpack.c.h.b16 %v789
    %v972 = vunpack.c.l.b16 %v790
    %v973 = vunpack.c.h.b16 %v790
    %v974 = vunpack.c.l.b16 %v791
    %v975 = vunpack.c.h.b16 %v791
    %v976 = vunpack.c.l.b16 %v792
    %v977 = vunpack.c.h.b16 %v792
    %v978 = vunpack.c.l.b16 %v793
    %v979 = vunpack.c.h.b16 %v793
    %v980 = vunpack.c.l.b16 %v794
    %v981 = vunpack.c.h.b16 %v794
    %v982 = vunpack.c.l.b16 %v795
    %v983 = vunpack.c.h.b16 %v795
    %v984 = vunpack.c.l.b16 %v796
    %v985 = vunpack.c.h.b16 %v796
    %v986 = vunpack.c.l.b16 %v797
    %v987 = vunpack.c.h.b16 %v797
    %v988 = vunpack.c.l.b16 %v798
    %v989 = vunpack.c.h.b16 %v798
    %v990 = vunpack.c.l.b16 %v799
    %v991 = vunpack.c.h.b16 %v799
    %v992 = vunpack.c.l.b16 %v800
    %v993 = vunpack.c.h.b16 %v800
    %v994 = vunpack.c.l.b16 %v801
    %v995 = vunpack.c.h.b16 %v801
    %v996 = vunpack.c.l.b16 %v802
    %v997 = vunpack.c.h.b16 %v802
    %v998 = vunpack.c.l.b16 %v803
    %v999 = vunpack.c.h.b16 %v803
    %v1000 = vunpack.c.l.b16 %v804
    %v1001 = vunpack.c.h.b16 %v804
    %v1002 = vunpack.c.l.b16 %v805
    %v1003 = vunpack.c.h.b16 %v805
    %v1004 = vunpack.c.l.b16 %v806
    %v1005 = vunpack.c.h.b16 %v806
    %v1006 = vunpack.c.l.b16 %v807
    %v1007 = vunpack.c.h.b16 %v807
    %v1008 = vunpack.c.l.b16 %v808
    %v1009 = vunpack.c.h.b16 %v808
    %v1010 = vunpack.c.l.b16 %v809
    %v1011 = vunpack.c.h.b16 %v809
    %v1012 = vunpack.c.l.b16 %v810
    %v1013 = vunpack.c.h.b16 %v810
    %v1014 = vpack.c.b16 %v888, %v886
    %v1015 = vpack.c.b16 %v889, %v887
    %v1016 = vpack.c.b16 %v892, %v890
    %v1017 = vpack.c.b16 %v893, %v891
    %v1018 = vpack.c.b16 %v896, %v894
    %v1019 = vpack.c.b16 %v897, %v895
    %v1020 = vpack.c.b16 %v900, %v898
    %v1021 = vpack.c.b16 %v901, %v899
    %v1022 = vpack.c.b16 %v904, %v902
    %v1023 = vpack.c.b16 %v905, %v903
    %v1024 = vpack.c.b16 %v908, %v906
    %v1025 = vpack.c.b16 %v909, %v907
    %v1026 = vpack.c.b16 %v912, %v910
    %v1027 = vpack.c.b16 %v913, %v911
    %v1028 = vpack.c.b16 %v916, %v914
    %v1029 = vpack.c.b16 %v917, %v915
    %v1030 = vpack.c.b16 %v920, %v918
    %v1031 = vpack.c.b16 %v921, %v919
    %v1032 = vpack.c.b16 %v924, %v922
    %v1033 = vpack.c.b16 %v925, %v923
    %v1034 = vpack.c.b16 %v928, %v926
    %v1035 = vpack.c.b16 %v929, %v927
    %v1036 = vpack.c.b16 %v932, %v930
    %v1037 = vpack.c.b16 %v933, %v931
    %v1038 = vpack.c.b16 %v936, %v934
    %v1039 = vpack.c.b16 %v937, %v935
    %v1040 = vpack.c.b16 %v940, %v938
    %v1041 = vpack.c.b16 %v941, %v939
    %v1042 = vpack.c.b16 %v944, %v942
    %v1043 = vpack.c.b16 %v945, %v943
    %v1044 = vpack.c.b16 %v948, %v946
    %v1045 = vpack.c.b16 %v949, %v947
    %v1046 = vpack.c.b16 %v952, %v950
    %v1047 = vpack.c.b16 %v953, %v951
    %v1048 = vpack.c.b16 %v956, %v954
    %v1049 = vpack.c.b16 %v957, %v955
    %v1050 = vpack.c.b16 %v960, %v958
    %v1051 = vpack.c.b16 %v961, %v959
    %v1052 = vpack.c.b16 %v964, %v962
    %v1053 = vpack.c.b16 %v965, %v963
    %v1054 = vpack.c.b16 %v968, %v966
    %v1055 = vpack.c.b16 %v969, %v967
    %v1056 = vpack.c.b16 %v972, %v970
    %v1057 = vpack.c.b16 %v973, %v971
    %v1058 = vpack.c.b16 %v976, %v974
    %v1059 = vpack.c.b16 %v977, %v975
    %v1060 = vpack.c.b16 %v980, %v978
    %v1061 = vpack.c.b16 %v981, %v979
    %v1062 = vpack.c.b16 %v984, %v982
    %v1063 = vpack.c.b16 %v985, %v983
    %v1064 = vpack.c.b16 %v988, %v986
    %v1065 = vpack.c.b16 %v989, %v987
    %v1066 = vpack.c.b16 %v992, %v990
    %v1067 = vpack.c.b16 %v993, %v991
    %v1068 = vpack.c.b16 %v996, %v994
    %v1069 = vpack.c.b16 %v997, %v995
    %v1070 = vpack.c.b16 %v1000, %v998
    %v1071 = vpack.c.b16 %v1001, %v999
    %v1072 = vpack.c.b16 %v1004, %v1002
    %v1073 = vpack.c.b16 %v1005, %v1003
    %v1074 = vpack.c.b16 %v1008, %v1006
    %v1075 = vpack.c.b16 %v1009, %v1007
    %v1076 = vpack.c.b16 %v1012, %v1010
    %v1077 = vpack.c.b16 %v1013, %v1011
    %1142 = vmatprep.subr.bf16.mxu0 %v1029
    %1143 = vmatpush1.bf16.msra.mxu0 %v1028
    %1144 = vmatprep.subr.bf16.mxu0 %v1027
    %1145 = vmatpush1.bf16.msra.mxu0 %v1026
    %1146 = vmatprep.subr.bf16.mxu0 %v1025
    %1147 = vmatpush1.bf16.msra.mxu0 %v1024
    %1148 = vmatprep.subr.bf16.mxu0 %v1023
    %1149 = vmatpush1.bf16.msra.mxu0 %v1022
    %1150 = vmatprep.subr.bf16.mxu0 %v1021
    %1151 = vmatpush1.bf16.msra.mxu0 %v1020
    %1152 = vmatprep.subr.bf16.mxu0 %v1019
    %1153 = vmatpush1.bf16.msra.mxu0 %v1018
    %1154 = vmatprep.subr.bf16.mxu0 %v1017
    %1155 = vmatpush1.bf16.msra.mxu0 %v1016
    %1156 = vmatprep.subr.bf16.mxu0 %v1015
    %1157 = vmatpush1.bf16.msra.mxu0 %v1014
    %1158 = vmatprep.subr.bf16.mxu0 %v1045
    %1159 = vmatpush2.bf16.msra.mxu0 %v1044
    %1160 = vmatprep.subr.bf16.mxu0 %v1043
    %1161 = vmatpush2.bf16.msra.mxu0 %v1042
    %1162 = vmatprep.subr.bf16.mxu0 %v1041
    %1163 = vmatpush2.bf16.msra.mxu0 %v1040
    %1164 = vmatprep.subr.bf16.mxu0 %v1039
    %1165 = vmatpush2.bf16.msra.mxu0 %v1038
    %1166 = vmatprep.subr.bf16.mxu0 %v1037
    %1167 = vmatpush2.bf16.msra.mxu0 %v1036
    %1168 = vmatprep.subr.bf16.mxu0 %v1035
    %1169 = vmatpush2.bf16.msra.mxu0 %v1034
    %1170 = vmatprep.subr.bf16.mxu0 %v1033
    %1171 = vmatpush2.bf16.msra.mxu0 %v1032
    %1172 = vmatprep.subr.bf16.mxu0 %v1031
    %1173 = vmatpush2.bf16.msra.mxu0 %v1030
    %1174 = vmatprep.mubr.bf16.mxu0 %v716
    %1175 = vmatmul.mubr.bf16.gmra.mxu0 %v715
    %v1176 = vpop.f32.mrf.mxu0
    %v1177 = vadd.f32 %v815, %v1176
    %v1178 = vpop.f32.mrf.mxu0
    %v1179 = vadd.f32 %v819, %v1178
    %v1180 = vpop.f32.mrf.mxu0
    %v1181 = vadd.f32 %v815, %v1180
    %v1182 = vpop.f32.mrf.mxu0
    %v1183 = vadd.f32 %v819, %v1182
    %1184 = vmatprep.mubr.bf16.mxu0 %v720
    %1185 = vmatmul.mubr.bf16.gmra.mxu0 %v719
    %v1186 = vpop.f32.mrf.mxu0
    %v1187 = vadd.f32 %v815, %v1186
    %v1188 = vpop.f32.mrf.mxu0
    %v1189 = vadd.f32 %v819, %v1188
    %v1190 = vpop.f32.mrf.mxu0
    %v1191 = vadd.f32 %v815, %v1190
    %v1192 = vpop.f32.mrf.mxu0
    %v1193 = vadd.f32 %v819, %v1192
    %1194 = vmatprep.mubr.bf16.mxu0 %v724
    %1195 = vmatmul.mubr.bf16.gmra.mxu0 %v723
    %v1196 = vpop.f32.mrf.mxu0
    %v1197 = vadd.f32 %v815, %v1196
    %v1198 = vpop.f32.mrf.mxu0
    %v1199 = vadd.f32 %v819, %v1198
    %v1200 = vpop.f32.mrf.mxu0
    %v1201 = vadd.f32 %v815, %v1200
    %v1202 = vpop.f32.mrf.mxu0
    %v1203 = vadd.f32 %v819, %v1202
    %1204 = vmatprep.mubr.bf16.mxu0 %v728
    %1205 = vmatmul.mubr.bf16.gmra.mxu0 %v727
    %v1206 = vpop.f32.mrf.mxu0
    %v1207 = vadd.f32 %v815, %v1206
    %v1208 = vpop.f32.mrf.mxu0
    %v1209 = vadd.f32 %v819, %v1208
    %v1210 = vpop.f32.mrf.mxu0
    %v1211 = vadd.f32 %v815, %v1210
    %v1212 = vpop.f32.mrf.mxu0
    %v1213 = vadd.f32 %v819, %v1212
    %1214 = vmatprep.mubr.bf16.mxu0 %v732
    %1215 = vmatmul.mubr.bf16.gmra.mxu0 %v731
    %v1216 = vpop.f32.mrf.mxu0
    %v1217 = vadd.f32 %v815, %v1216
    %v1218 = vpop.f32.mrf.mxu0
    %v1219 = vadd.f32 %v819, %v1218
    %v1220 = vpop.f32.mrf.mxu0
    %v1221 = vadd.f32 %v815, %v1220
    %v1222 = vpop.f32.mrf.mxu0
    %v1223 = vadd.f32 %v819, %v1222
    %1224 = vmatprep.mubr.bf16.mxu0 %v736
    %1225 = vmatmul.mubr.bf16.gmra.mxu0 %v735
    %v1226 = vpop.f32.mrf.mxu0
    %v1227 = vadd.f32 %v815, %v1226
    %v1228 = vpop.f32.mrf.mxu0
    %v1229 = vadd.f32 %v819, %v1228
    %v1230 = vpop.f32.mrf.mxu0
    %v1231 = vadd.f32 %v815, %v1230
    %v1232 = vpop.f32.mrf.mxu0
    %v1233 = vadd.f32 %v819, %v1232
    %1234 = vmatprep.mubr.bf16.mxu0 %v740
    %1235 = vmatmul.mubr.bf16.gmra.mxu0 %v739
    %v1236 = vpop.f32.mrf.mxu0
    %v1237 = vadd.f32 %v815, %v1236
    %v1238 = vpop.f32.mrf.mxu0
    %v1239 = vadd.f32 %v819, %v1238
    %v1240 = vpop.f32.mrf.mxu0
    %v1241 = vadd.f32 %v815, %v1240
    %v1242 = vpop.f32.mrf.mxu0
    %v1243 = vadd.f32 %v819, %v1242
    %1244 = vmatprep.mubr.bf16.mxu0 %v744
    %1245 = vmatmul.mubr.bf16.gmra.mxu0 %v743
    %v1246 = vpop.f32.mrf.mxu0
    %v1247 = vadd.f32 %v815, %v1246
    %v1248 = vpop.f32.mrf.mxu0
    %v1249 = vadd.f32 %v819, %v1248
    %v1250 = vpop.f32.mrf.mxu0
    %v1251 = vadd.f32 %v815, %v1250
    %v1252 = vpop.f32.mrf.mxu0
    %v1253 = vadd.f32 %v819, %v1252
    %1254 = vdwg.mxu0
    %1255 = vmatprep.subr.bf16.mxu0 %v1061
    %1256 = vmatpush1.bf16.msra.mxu0 %v1060
    %1257 = vmatprep.subr.bf16.mxu0 %v1059
    %1258 = vmatpush1.bf16.msra.mxu0 %v1058
    %1259 = vmatprep.subr.bf16.mxu0 %v1057
    %1260 = vmatpush1.bf16.msra.mxu0 %v1056
    %1261 = vmatprep.subr.bf16.mxu0 %v1055
    %1262 = vmatpush1.bf16.msra.mxu0 %v1054
    %1263 = vmatprep.subr.bf16.mxu0 %v1053
    %1264 = vmatpush1.bf16.msra.mxu0 %v1052
    %1265 = vmatprep.subr.bf16.mxu0 %v1051
    %1266 = vmatpush1.bf16.msra.mxu0 %v1050
    %1267 = vmatprep.subr.bf16.mxu0 %v1049
    %1268 = vmatpush1.bf16.msra.mxu0 %v1048
    %1269 = vmatprep.subr.bf16.mxu0 %v1047
    %1270 = vmatpush1.bf16.msra.mxu0 %v1046
    %1271 = vmatprep.subr.bf16.mxu0 %v1077
    %1272 = vmatpush2.bf16.msra.mxu0 %v1076
    %1273 = vmatprep.subr.bf16.mxu0 %v1075
    %1274 = vmatpush2.bf16.msra.mxu0 %v1074
    %1275 = vmatprep.subr.bf16.mxu0 %v1073
    %1276 = vmatpush2.bf16.msra.mxu0 %v1072
    %1277 = vmatprep.subr.bf16.mxu0 %v1071
    %1278 = vmatpush2.bf16.msra.mxu0 %v1070
    %1279 = vmatprep.subr.bf16.mxu0 %v1069
    %1280 = vmatpush2.bf16.msra.mxu0 %v1068
    %1281 = vmatprep.subr.bf16.mxu0 %v1067
    %1282 = vmatpush2.bf16.msra.mxu0 %v1066
    %1283 = vmatprep.subr.bf16.mxu0 %v1065
    %1284 = vmatpush2.bf16.msra.mxu0 %v1064
    %1285 = vmatprep.subr.bf16.mxu0 %v1063
    %1286 = vmatpush2.bf16.msra.mxu0 %v1062
    %1287 = vmatprep.mubr.bf16.mxu0 %v718
    %1288 = vmatmul.mubr.bf16.gmra.mxu0 %v717
    %v1289 = vpop.f32.mrf.mxu0
    %v1290 = vadd.f32 %v1177, %v1289
    %v1291 = vpop.f32.mrf.mxu0
    %v1292 = vadd.f32 %v1179, %v1291
    %v1293 = vpop.f32.mrf.mxu0
    %v1294 = vadd.f32 %v1181, %v1293
    %v1295 = vpop.f32.mrf.mxu0
    %v1296 = vadd.f32 %v1183, %v1295
    %1297 = vmatprep.mubr.bf16.mxu0 %v722
    %1298 = vmatmul.mubr.bf16.gmra.mxu0 %v721
    %v1299 = vpop.f32.mrf.mxu0
    %v1300 = vadd.f32 %v1187, %v1299
    %v1301 = vpop.f32.mrf.mxu0
    %v1302 = vadd.f32 %v1189, %v1301
    %v1303 = vpop.f32.mrf.mxu0
    %v1304 = vadd.f32 %v1191, %v1303
    %v1305 = vpop.f32.mrf.mxu0
    %v1306 = vadd.f32 %v1193, %v1305
    %1307 = vmatprep.mubr.bf16.mxu0 %v726
    %1308 = vmatmul.mubr.bf16.gmra.mxu0 %v725
    %v1309 = vpop.f32.mrf.mxu0
    %v1310 = vadd.f32 %v1197, %v1309
    %v1311 = vpop.f32.mrf.mxu0
    %v1312 = vadd.f32 %v1199, %v1311
    %v1313 = vpop.f32.mrf.mxu0
    %v1314 = vadd.f32 %v1201, %v1313
    %v1315 = vpop.f32.mrf.mxu0
    %v1316 = vadd.f32 %v1203, %v1315
    %1317 = vmatprep.mubr.bf16.mxu0 %v730
    %1318 = vmatmul.mubr.bf16.gmra.mxu0 %v729
    %v1319 = vpop.f32.mrf.mxu0
    %v1320 = vadd.f32 %v1207, %v1319
    %v1321 = vpop.f32.mrf.mxu0
    %v1322 = vadd.f32 %v1209, %v1321
    %v1323 = vpop.f32.mrf.mxu0
    %v1324 = vadd.f32 %v1211, %v1323
    %v1325 = vpop.f32.mrf.mxu0
    %v1326 = vadd.f32 %v1213, %v1325
    %1327 = vmatprep.mubr.bf16.mxu0 %v734
    %1328 = vmatmul.mubr.bf16.gmra.mxu0 %v733
    %v1329 = vpop.f32.mrf.mxu0
    %v1330 = vadd.f32 %v1217, %v1329
    %v1331 = vpop.f32.mrf.mxu0
    %v1332 = vadd.f32 %v1219, %v1331
    %v1333 = vpop.f32.mrf.mxu0
    %v1334 = vadd.f32 %v1221, %v1333
    %v1335 = vpop.f32.mrf.mxu0
    %v1336 = vadd.f32 %v1223, %v1335
    %1337 = vmatprep.mubr.bf16.mxu0 %v738
    %1338 = vmatmul.mubr.bf16.gmra.mxu0 %v737
    %v1339 = vpop.f32.mrf.mxu0
    %v1340 = vadd.f32 %v1227, %v1339
    %v1341 = vpop.f32.mrf.mxu0
    %v1342 = vadd.f32 %v1229, %v1341
    %v1343 = vpop.f32.mrf.mxu0
    %v1344 = vadd.f32 %v1231, %v1343
    %v1345 = vpop.f32.mrf.mxu0
    %v1346 = vadd.f32 %v1233, %v1345
    %1347 = vmatprep.mubr.bf16.mxu0 %v742
    %1348 = vmatmul.mubr.bf16.gmra.mxu0 %v741
    %v1349 = vpop.f32.mrf.mxu0
    %v1350 = vadd.f32 %v1237, %v1349
    %v1351 = vpop.f32.mrf.mxu0
    %v1352 = vadd.f32 %v1239, %v1351
    %v1353 = vpop.f32.mrf.mxu0
    %v1354 = vadd.f32 %v1241, %v1353
    %v1355 = vpop.f32.mrf.mxu0
    %v1356 = vadd.f32 %v1243, %v1355
    %1357 = vmatprep.mubr.bf16.mxu0 %v746
    %1358 = vmatmul.mubr.bf16.gmra.mxu0 %v745
    %v1359 = vpop.f32.mrf.mxu0
    %v1360 = vadd.f32 %v1247, %v1359
    %v1361 = vpop.f32.mrf.mxu0
    %v1362 = vadd.f32 %v1249, %v1361
    %v1363 = vpop.f32.mrf.mxu0
    %v1364 = vadd.f32 %v1251, %v1363
    %v1365 = vpop.f32.mrf.mxu0
    %v1366 = vadd.f32 %v1253, %v1365
    %1367 = vdwg.mxu0
    %v1368 = vmax.f32 %v1290, 0.0
    %v1369 = vmax.f32 %v1292, 0.0
    %v1370 = vmax.f32 %v1294, 0.0
    %v1371 = vmax.f32 %v1296, 0.0
    %v1372 = vmax.f32 %v1300, 0.0
    %v1373 = vmax.f32 %v1302, 0.0
    %v1374 = vmax.f32 %v1304, 0.0
    %v1375 = vmax.f32 %v1306, 0.0
    %v1376 = vmax.f32 %v1310, 0.0
    %v1377 = vmax.f32 %v1312, 0.0
    %v1378 = vmax.f32 %v1314, 0.0
    %v1379 = vmax.f32 %v1316, 0.0
    %v1380 = vmax.f32 %v1320, 0.0
    %v1381 = vmax.f32 %v1322, 0.0
    %v1382 = vmax.f32 %v1324, 0.0
    %v1383 = vmax.f32 %v1326, 0.0
    %v1384 = vmax.f32 %v1330, 0.0
    %v1385 = vmax.f32 %v1332, 0.0
    %v1386 = vmax.f32 %v1334, 0.0
    %v1387 = vmax.f32 %v1336, 0.0
    %v1388 = vmax.f32 %v1340, 0.0
    %v1389 = vmax.f32 %v1342, 0.0
    %v1390 = vmax.f32 %v1344, 0.0
    %v1391 = vmax.f32 %v1346, 0.0
    %v1392 = vmax.f32 %v1350, 0.0
    %v1393 = vmax.f32 %v1352, 0.0
    %v1394 = vmax.f32 %v1354, 0.0
    %v1395 = vmax.f32 %v1356, 0.0
    %v1396 = vmax.f32 %v1360, 0.0
    %v1397 = vmax.f32 %v1362, 0.0
    %v1398 = vmax.f32 %v1364, 0.0
    %v1399 = vmax.f32 %v1366, 0.0
    %v1400 = vpack.c.bf16 %v1370, %v1368
    %v1401 = vpack.c.bf16 %v1371, %v1369
    %v1402 = vpack.c.bf16 %v1374, %v1372
    %v1403 = vpack.c.bf16 %v1375, %v1373
    %v1404 = vpack.c.bf16 %v1378, %v1376
    %v1405 = vpack.c.bf16 %v1379, %v1377
    %v1406 = vpack.c.bf16 %v1382, %v1380
    %v1407 = vpack.c.bf16 %v1383, %v1381
    %v1408 = vpack.c.bf16 %v1386, %v1384
    %v1409 = vpack.c.bf16 %v1387, %v1385
    %v1410 = vpack.c.bf16 %v1390, %v1388
    %v1411 = vpack.c.bf16 %v1391, %v1389
    %v1412 = vpack.c.bf16 %v1394, %v1392
    %v1413 = vpack.c.bf16 %v1395, %v1393
    %v1414 = vpack.c.bf16 %v1398, %v1396
    %v1415 = vpack.c.bf16 %v1399, %v1397
    %v1416 = vld [vmem:[#allocation6] sm:$0xf]
    %v1417 = vld [vmem:[#allocation6 + $0x4] sm:$0xf]
    %v1418 = vld [vmem:[#allocation6 + $0x8] sm:$0xf]
    %v1419 = vld [vmem:[#allocation6 + $0xc] sm:$0xf]
    %v1420 = vld [vmem:[#allocation6 + $0x10] sm:$0xf]
    %v1421 = vld [vmem:[#allocation6 + $0x14] sm:$0xf]
    %v1422 = vld [vmem:[#allocation6 + $0x18] sm:$0xf]
    %v1423 = vld [vmem:[#allocation6 + $0x1c] sm:$0xf]
    %v1424 = vld [vmem:[#allocation6 + $0x20] sm:$0xf]
    %v1425 = vld [vmem:[#allocation6 + $0x24] sm:$0xf]
    %v1426 = vld [vmem:[#allocation6 + $0x28] sm:$0xf]
    %v1427 = vld [vmem:[#allocation6 + $0x2c] sm:$0xf]
    %v1428 = vld [vmem:[#allocation6 + $0x30] sm:$0xf]
    %v1429 = vld [vmem:[#allocation6 + $0x34] sm:$0xf]
    %v1430 = vld [vmem:[#allocation6 + $0x38] sm:$0xf]
    %v1431 = vld [vmem:[#allocation6 + $0x3c] sm:$0xf]
    %v1432 = vld [vmem:[#allocation6 + $0x40] sm:$0xf]
    %v1433 = vld [vmem:[#allocation6 + $0x44] sm:$0xf]
    %v1434 = vld [vmem:[#allocation6 + $0x48] sm:$0xf]
    %v1435 = vld [vmem:[#allocation6 + $0x4c] sm:$0xf]
    %v1436 = vld [vmem:[#allocation6 + $0x50] sm:$0xf]
    %v1437 = vld [vmem:[#allocation6 + $0x54] sm:$0xf]
    %v1438 = vld [vmem:[#allocation6 + $0x58] sm:$0xf]
    %v1439 = vld [vmem:[#allocation6 + $0x5c] sm:$0xf]
    %v1440 = vld [vmem:[#allocation6 + $0x60] sm:$0xf]
    %v1441 = vld [vmem:[#allocation6 + $0x64] sm:$0xf]
    %v1442 = vld [vmem:[#allocation6 + $0x68] sm:$0xf]
    %v1443 = vld [vmem:[#allocation6 + $0x6c] sm:$0xf]
    %v1444 = vld [vmem:[#allocation6 + $0x70] sm:$0xf]
    %v1445 = vld [vmem:[#allocation6 + $0x74] sm:$0xf]
    %v1446 = vld [vmem:[#allocation6 + $0x78] sm:$0xf]
    %v1447 = vld [vmem:[#allocation6 + $0x7c] sm:$0xf]
    %v1449 = vlaneseq
    %v1450 = vshrl.u32 %v1449, 7
    %v1451 = vsub.s32 0, %v1450
    %v1452 = vrot.slane %v85, %v1451
    %v1486 = vunpack.c.l.b16 %v1416
    %v1487 = vunpack.c.l.b16 %v1417
    %v1488 = vunpack.c.l.b16 %v1418
    %v1489 = vunpack.c.l.b16 %v1419
    %v1490 = vunpack.c.l.b16 %v1420
    %v1491 = vunpack.c.l.b16 %v1421
    %v1492 = vunpack.c.l.b16 %v1422
    %v1493 = vunpack.c.l.b16 %v1423
    %v1494 = vunpack.c.l.b16 %v1424
    %v1495 = vunpack.c.l.b16 %v1425
    %v1496 = vunpack.c.l.b16 %v1426
    %v1497 = vunpack.c.l.b16 %v1427
    %v1498 = vunpack.c.l.b16 %v1428
    %v1499 = vunpack.c.l.b16 %v1429
    %v1500 = vunpack.c.l.b16 %v1430
    %v1501 = vunpack.c.l.b16 %v1431
    %v1502 = vunpack.c.l.b16 %v1432
    %v1503 = vunpack.c.l.b16 %v1433
    %v1504 = vunpack.c.l.b16 %v1434
    %v1505 = vunpack.c.l.b16 %v1435
    %v1506 = vunpack.c.l.b16 %v1436
    %v1507 = vunpack.c.l.b16 %v1437
    %v1508 = vunpack.c.l.b16 %v1438
    %v1509 = vunpack.c.l.b16 %v1439
    %v1510 = vunpack.c.l.b16 %v1440
    %v1511 = vunpack.c.l.b16 %v1441
    %v1512 = vunpack.c.l.b16 %v1442
    %v1513 = vunpack.c.l.b16 %v1443
    %v1514 = vunpack.c.l.b16 %v1444
    %v1515 = vunpack.c.l.b16 %v1445
    %v1516 = vunpack.c.l.b16 %v1446
    %v1517 = vunpack.c.l.b16 %v1447
    %v1518 = vpack.c.b16 %v1487, %v1486
    %v1519 = vpack.c.b16 %v1489, %v1488
    %v1520 = vpack.c.b16 %v1491, %v1490
    %v1521 = vpack.c.b16 %v1493, %v1492
    %v1522 = vpack.c.b16 %v1495, %v1494
    %v1523 = vpack.c.b16 %v1497, %v1496
    %v1524 = vpack.c.b16 %v1499, %v1498
    %v1525 = vpack.c.b16 %v1501, %v1500
    %v1526 = vpack.c.b16 %v1503, %v1502
    %v1527 = vpack.c.b16 %v1505, %v1504
    %v1528 = vpack.c.b16 %v1507, %v1506
    %v1529 = vpack.c.b16 %v1509, %v1508
    %v1530 = vpack.c.b16 %v1511, %v1510
    %v1531 = vpack.c.b16 %v1513, %v1512
    %v1532 = vpack.c.b16 %v1515, %v1514
    %v1533 = vpack.c.b16 %v1517, %v1516
    %1550 = vmatprep.subr.bf16.mxu0 0
    %1551 = vmatpush1.bf16.msra.mxu0 %v1525
    %1552 = vmatprep.subr.bf16.mxu0 0
    %1553 = vmatpush1.bf16.msra.mxu0 %v1524
    %1554 = vmatprep.subr.bf16.mxu0 0
    %1555 = vmatpush1.bf16.msra.mxu0 %v1523
    %1556 = vmatprep.subr.bf16.mxu0 0
    %1557 = vmatpush1.bf16.msra.mxu0 %v1522
    %1558 = vmatprep.subr.bf16.mxu0 0
    %1559 = vmatpush1.bf16.msra.mxu0 %v1521
    %1560 = vmatprep.subr.bf16.mxu0 0
    %1561 = vmatpush1.bf16.msra.mxu0 %v1520
    %1562 = vmatprep.subr.bf16.mxu0 0
    %1563 = vmatpush1.bf16.msra.mxu0 %v1519
    %1564 = vmatprep.subr.bf16.mxu0 0
    %1565 = vmatpush1.bf16.msra.mxu0 %v1518
    %1566 = vmatprep.subr.bf16.mxu0 0
    %1567 = vmatpush2.bf16.msra.mxu0 %v1533
    %1568 = vmatprep.subr.bf16.mxu0 0
    %1569 = vmatpush2.bf16.msra.mxu0 %v1532
    %1570 = vmatprep.subr.bf16.mxu0 0
    %1571 = vmatpush2.bf16.msra.mxu0 %v1531
    %1572 = vmatprep.subr.bf16.mxu0 0
    %1573 = vmatpush2.bf16.msra.mxu0 %v1530
    %1574 = vmatprep.subr.bf16.mxu0 0
    %1575 = vmatpush2.bf16.msra.mxu0 %v1529
    %1576 = vmatprep.subr.bf16.mxu0 0
    %1577 = vmatpush2.bf16.msra.mxu0 %v1528
    %1578 = vmatprep.subr.bf16.mxu0 0
    %1579 = vmatpush2.bf16.msra.mxu0 %v1527
    %1580 = vmatprep.subr.bf16.mxu0 0
    %1581 = vmatpush2.bf16.msra.mxu0 %v1526
    %1582 = vmatprep.mubr.bf16.mxu0 %v1401
    %1583 = vmatmul.mubr.bf16.gmra.mxu0 %v1400
    %v1584 = vpop.f32.mrf.mxu0
    %v1585 = vadd.f32 %v1452, %v1584
    %v1586 = vpop.f32.mrf.mxu0
    %v1587 = vpop.f32.mrf.mxu0
    %v1588 = vadd.f32 %v1452, %v1587
    %v1589 = vpop.f32.mrf.mxu0
    %1590 = vmatprep.mubr.bf16.mxu0 %v1403
    %1591 = vmatmul.mubr.bf16.gmra.mxu0 %v1402
    %v1592 = vpop.f32.mrf.mxu0
    %v1593 = vadd.f32 %v1452, %v1592
    %v1594 = vpop.f32.mrf.mxu0
    %v1595 = vpop.f32.mrf.mxu0
    %v1596 = vadd.f32 %v1452, %v1595
    %v1597 = vpop.f32.mrf.mxu0
    %1598 = vmatprep.mubr.bf16.mxu0 %v1405
    %1599 = vmatmul.mubr.bf16.gmra.mxu0 %v1404
    %v1600 = vpop.f32.mrf.mxu0
    %v1601 = vadd.f32 %v1452, %v1600
    %v1602 = vpop.f32.mrf.mxu0
    %v1603 = vpop.f32.mrf.mxu0
    %v1604 = vadd.f32 %v1452, %v1603
    %v1605 = vpop.f32.mrf.mxu0
    %1606 = vmatprep.mubr.bf16.mxu0 %v1407
    %1607 = vmatmul.mubr.bf16.gmra.mxu0 %v1406
    %v1608 = vpop.f32.mrf.mxu0
    %v1609 = vadd.f32 %v1452, %v1608
    %v1610 = vpop.f32.mrf.mxu0
    %v1611 = vpop.f32.mrf.mxu0
    %v1612 = vadd.f32 %v1452, %v1611
    %v1613 = vpop.f32.mrf.mxu0
    %1614 = vmatprep.mubr.bf16.mxu0 %v1409
    %1615 = vmatmul.mubr.bf16.gmra.mxu0 %v1408
    %v1616 = vpop.f32.mrf.mxu0
    %v1617 = vadd.f32 %v1452, %v1616
    %v1618 = vpop.f32.mrf.mxu0
    %v1619 = vpop.f32.mrf.mxu0
    %v1620 = vadd.f32 %v1452, %v1619
    %v1621 = vpop.f32.mrf.mxu0
    %1622 = vmatprep.mubr.bf16.mxu0 %v1411
    %1623 = vmatmul.mubr.bf16.gmra.mxu0 %v1410
    %v1624 = vpop.f32.mrf.mxu0
    %v1625 = vadd.f32 %v1452, %v1624
    %v1626 = vpop.f32.mrf.mxu0
    %v1627 = vpop.f32.mrf.mxu0
    %v1628 = vadd.f32 %v1452, %v1627
    %v1629 = vpop.f32.mrf.mxu0
    %1630 = vmatprep.mubr.bf16.mxu0 %v1413
    %1631 = vmatmul.mubr.bf16.gmra.mxu0 %v1412
    %v1632 = vpop.f32.mrf.mxu0
    %v1633 = vadd.f32 %v1452, %v1632
    %v1634 = vpop.f32.mrf.mxu0
    %v1635 = vpop.f32.mrf.mxu0
    %v1636 = vadd.f32 %v1452, %v1635
    %v1637 = vpop.f32.mrf.mxu0
    %1638 = vmatprep.mubr.bf16.mxu0 %v1415
    %1639 = vmatmul.mubr.bf16.gmra.mxu0 %v1414
    %v1640 = vpop.f32.mrf.mxu0
    %v1641 = vadd.f32 %v1452, %v1640
    %v1642 = vpop.f32.mrf.mxu0
    %v1643 = vpop.f32.mrf.mxu0
    %v1644 = vadd.f32 %v1452, %v1643
    %v1645 = vpop.f32.mrf.mxu0
    %1646 = vdwg.mxu0
    %v1647 = vmax.f32 %v1585, 0.0
    %v1648 = vmax.f32 %v1588, 0.0
    %v1649 = vmax.f32 %v1593, 0.0
    %v1650 = vmax.f32 %v1596, 0.0
    %v1651 = vmax.f32 %v1601, 0.0
    %v1652 = vmax.f32 %v1604, 0.0
    %v1653 = vmax.f32 %v1609, 0.0
    %v1654 = vmax.f32 %v1612, 0.0
    %v1655 = vmax.f32 %v1617, 0.0
    %v1656 = vmax.f32 %v1620, 0.0
    %v1657 = vmax.f32 %v1625, 0.0
    %v1658 = vmax.f32 %v1628, 0.0
    %v1659 = vmax.f32 %v1633, 0.0
    %v1660 = vmax.f32 %v1636, 0.0
    %v1661 = vmax.f32 %v1641, 0.0
    %v1662 = vmax.f32 %v1644, 0.0
    %v1663 = vpack.c.bf16 %v1648, %v1647
    %v1664 = vpack.c.bf16 %v1650, %v1649
    %v1665 = vpack.c.bf16 %v1652, %v1651
    %v1666 = vpack.c.bf16 %v1654, %v1653
    %v1667 = vpack.c.bf16 %v1656, %v1655
    %v1668 = vpack.c.bf16 %v1658, %v1657
    %v1669 = vpack.c.bf16 %v1660, %v1659
    %v1670 = vpack.c.bf16 %v1662, %v1661
    %v1671 = vld [vmem:[#allocation7] sm:$0xf]
    %v1672 = vld [vmem:[#allocation7 + $0x4] sm:$0xf]
    %v1673 = vld [vmem:[#allocation7 + $0x8] sm:$0xf]
    %v1674 = vld [vmem:[#allocation7 + $0xc] sm:$0xf]
    %v1675 = vld [vmem:[#allocation7 + $0x10] sm:$0xf]
    %v1676 = vld [vmem:[#allocation7 + $0x14] sm:$0xf]
    %v1677 = vld [vmem:[#allocation7 + $0x18] sm:$0xf]
    %v1678 = vld [vmem:[#allocation7 + $0x1c] sm:$0xf]
    %v1679 = vld [vmem:[#allocation7 + $0x20] sm:$0xf]
    %v1680 = vld [vmem:[#allocation7 + $0x24] sm:$0xf]
    %v1681 = vld [vmem:[#allocation7 + $0x28] sm:$0xf]
    %v1682 = vld [vmem:[#allocation7 + $0x2c] sm:$0xf]
    %v1683 = vld [vmem:[#allocation7 + $0x30] sm:$0xf]
    %v1684 = vld [vmem:[#allocation7 + $0x34] sm:$0xf]
    %v1685 = vld [vmem:[#allocation7 + $0x38] sm:$0xf]
    %v1686 = vld [vmem:[#allocation7 + $0x3c] sm:$0xf]
    %v1688 = vlaneseq
    %v1689 = vshrl.u32 %v1688, 7
    %v1690 = vsub.s32 0, %v1689
    %v1691 = vrot.slane %v86, %v1690
    %v1709 = vunpack.c.l.b16 %v1671
    %v1710 = vunpack.c.l.b16 %v1672
    %v1711 = vunpack.c.l.b16 %v1673
    %v1712 = vunpack.c.l.b16 %v1674
    %v1713 = vunpack.c.l.b16 %v1675
    %v1714 = vunpack.c.l.b16 %v1676
    %v1715 = vunpack.c.l.b16 %v1677
    %v1716 = vunpack.c.l.b16 %v1678
    %v1717 = vunpack.c.l.b16 %v1679
    %v1718 = vunpack.c.l.b16 %v1680
    %v1719 = vunpack.c.l.b16 %v1681
    %v1720 = vunpack.c.l.b16 %v1682
    %v1721 = vunpack.c.l.b16 %v1683
    %v1722 = vunpack.c.l.b16 %v1684
    %v1723 = vunpack.c.l.b16 %v1685
    %v1724 = vunpack.c.l.b16 %v1686
    %v1725 = vpack.c.b16 %v1710, %v1709
    %v1726 = vpack.c.b16 %v1712, %v1711
    %v1727 = vpack.c.b16 %v1714, %v1713
    %v1728 = vpack.c.b16 %v1716, %v1715
    %v1729 = vpack.c.b16 %v1718, %v1717
    %v1730 = vpack.c.b16 %v1720, %v1719
    %v1731 = vpack.c.b16 %v1722, %v1721
    %v1732 = vpack.c.b16 %v1724, %v1723
    %1741 = vmatprep.subr.bf16.mxu0 0
    %1742 = vmatpush1.bf16.msra.mxu0 %v1732
    %1743 = vmatprep.subr.bf16.mxu0 0
    %1744 = vmatpush1.bf16.msra.mxu0 %v1731
    %1745 = vmatprep.subr.bf16.mxu0 0
    %1746 = vmatpush1.bf16.msra.mxu0 %v1730
    %1747 = vmatprep.subr.bf16.mxu0 0
    %1748 = vmatpush1.bf16.msra.mxu0 %v1729
    %1749 = vmatprep.subr.bf16.mxu0 0
    %1750 = vmatpush1.bf16.msra.mxu0 %v1728
    %1751 = vmatprep.subr.bf16.mxu0 0
    %1752 = vmatpush1.bf16.msra.mxu0 %v1727
    %1753 = vmatprep.subr.bf16.mxu0 0
    %1754 = vmatpush1.bf16.msra.mxu0 %v1726
    %1755 = vmatprep.subr.bf16.mxu0 0
    %1756 = vmatpush1.bf16.msra.mxu0 %v1725
    %1757 = vmatprep.subr.bf16.mxu0 0
    %1758 = vmatpush2.bf16.msra.mxu0 0
    %1759 = vmatprep.subr.bf16.mxu0 0
    %1760 = vmatpush2.bf16.msra.mxu0 0
    %1761 = vmatprep.subr.bf16.mxu0 0
    %1762 = vmatpush2.bf16.msra.mxu0 0
    %1763 = vmatprep.subr.bf16.mxu0 0
    %1764 = vmatpush2.bf16.msra.mxu0 0
    %1765 = vmatprep.subr.bf16.mxu0 0
    %1766 = vmatpush2.bf16.msra.mxu0 0
    %1767 = vmatprep.subr.bf16.mxu0 0
    %1768 = vmatpush2.bf16.msra.mxu0 0
    %1769 = vmatprep.subr.bf16.mxu0 0
    %1770 = vmatpush2.bf16.msra.mxu0 0
    %1771 = vmatprep.subr.bf16.mxu0 0
    %1772 = vmatpush2.bf16.msra.mxu0 0
    %1773 = vmatprep.mubr.bf16.mxu0 0
    %1774 = vmatmul.mubr.bf16.gmra.mxu0 %v1663
    %v1775 = vpop.f32.mrf.mxu0
    %v1776 = vadd.f32 %v1691, %v1775
    %v1777 = vpop.f32.mrf.mxu0
    %v1778 = vpop.f32.mrf.mxu0
    %v1779 = vadd.f32 %v1691, %v1778
    %v1780 = vpop.f32.mrf.mxu0
    %1781 = vmatprep.mubr.bf16.mxu0 0
    %1782 = vmatmul.mubr.bf16.gmra.mxu0 %v1664
    %v1783 = vpop.f32.mrf.mxu0
    %v1784 = vadd.f32 %v1691, %v1783
    %v1785 = vpop.f32.mrf.mxu0
    %v1786 = vpop.f32.mrf.mxu0
    %v1787 = vadd.f32 %v1691, %v1786
    %v1788 = vpop.f32.mrf.mxu0
    %1789 = vmatprep.mubr.bf16.mxu0 0
    %1790 = vmatmul.mubr.bf16.gmra.mxu0 %v1665
    %v1791 = vpop.f32.mrf.mxu0
    %v1792 = vadd.f32 %v1691, %v1791
    %v1793 = vpop.f32.mrf.mxu0
    %v1794 = vpop.f32.mrf.mxu0
    %v1795 = vadd.f32 %v1691, %v1794
    %v1796 = vpop.f32.mrf.mxu0
    %1797 = vmatprep.mubr.bf16.mxu0 0
    %1798 = vmatmul.mubr.bf16.gmra.mxu0 %v1666
    %v1799 = vpop.f32.mrf.mxu0
    %v1800 = vadd.f32 %v1691, %v1799
    %v1801 = vpop.f32.mrf.mxu0
    %v1802 = vpop.f32.mrf.mxu0
    %v1803 = vadd.f32 %v1691, %v1802
    %v1804 = vpop.f32.mrf.mxu0
    %1805 = vmatprep.mubr.bf16.mxu0 0
    %1806 = vmatmul.mubr.bf16.gmra.mxu0 %v1667
    %v1807 = vpop.f32.mrf.mxu0
    %v1808 = vadd.f32 %v1691, %v1807
    %v1809 = vpop.f32.mrf.mxu0
    %v1810 = vpop.f32.mrf.mxu0
    %v1811 = vadd.f32 %v1691, %v1810
    %v1812 = vpop.f32.mrf.mxu0
    %1813 = vmatprep.mubr.bf16.mxu0 0
    %1814 = vmatmul.mubr.bf16.gmra.mxu0 %v1668
    %v1815 = vpop.f32.mrf.mxu0
    %v1816 = vadd.f32 %v1691, %v1815
    %v1817 = vpop.f32.mrf.mxu0
    %v1818 = vpop.f32.mrf.mxu0
    %v1819 = vadd.f32 %v1691, %v1818
    %v1820 = vpop.f32.mrf.mxu0
    %1821 = vmatprep.mubr.bf16.mxu0 0
    %1822 = vmatmul.mubr.bf16.gmra.mxu0 %v1669
    %v1823 = vpop.f32.mrf.mxu0
    %v1824 = vadd.f32 %v1691, %v1823
    %v1825 = vpop.f32.mrf.mxu0
    %v1826 = vpop.f32.mrf.mxu0
    %v1827 = vadd.f32 %v1691, %v1826
    %v1828 = vpop.f32.mrf.mxu0
    %1829 = vmatprep.mubr.bf16.mxu0 0
    %1830 = vmatmul.mubr.bf16.gmra.mxu0 %v1670
    %v1831 = vpop.f32.mrf.mxu0
    %v1832 = vadd.f32 %v1691, %v1831
    %v1833 = vpop.f32.mrf.mxu0
    %v1834 = vpop.f32.mrf.mxu0
    %v1835 = vadd.f32 %v1691, %v1834
    %v1836 = vpop.f32.mrf.mxu0
    %1837 = vdwg.mxu0
    %1838 = vst [vmem:[%s7] sm:$0xff] %v230
    %1839 = vst [vmem:[%s7 + $0x8] sm:$0xff] %v232
    %1840 = vst [vmem:[%s7 + $0x10] sm:$0xff] %v1776
    %1841 = vst [vmem:[%s7 + $0x18] sm:$0xff] %v234
    %1842 = vst [vmem:[%s7 + $0x20] sm:$0xff] %v236
    %1843 = vst [vmem:[%s7 + $0x28] sm:$0xff] %v1779
    %1844 = vst [vmem:[%s7 + $0x30] sm:$0xff] %v240
    %1845 = vst [vmem:[%s7 + $0x38] sm:$0xff] %v242
    %1846 = vst [vmem:[%s7 + $0x40] sm:$0xff] %v1784
    %1847 = vst [vmem:[%s7 + $0x48] sm:$0xff] %v244
    %1848 = vst [vmem:[%s7 + $0x50] sm:$0xff] %v246
    %1849 = vst [vmem:[%s7 + $0x58] sm:$0xff] %v1787
    %1850 = vst [vmem:[%s7 + $0x60] sm:$0xff] %v250
    %1851 = vst [vmem:[%s7 + $0x68] sm:$0xff] %v252
    %1852 = vst [vmem:[%s7 + $0x70] sm:$0xff] %v1792
    %1853 = vst [vmem:[%s7 + $0x78] sm:$0xff] %v254
    %1854 = vst [vmem:[%s7 + $0x80] sm:$0xff] %v256
    %1855 = vst [vmem:[%s7 + $0x88] sm:$0xff] %v1795
    %1856 = vst [vmem:[%s7 + $0x90] sm:$0xff] %v260
    %1857 = vst [vmem:[%s7 + $0x98] sm:$0xff] %v262
    %1858 = vst [vmem:[%s7 + $0xa0] sm:$0xff] %v1800
    %1859 = vst [vmem:[%s7 + $0xa8] sm:$0xff] %v264
    %1860 = vst [vmem:[%s7 + $0xb0] sm:$0xff] %v266
    %1861 = vst [vmem:[%s7 + $0xb8] sm:$0xff] %v1803
    %1862 = vst [vmem:[%s7 + $0xc0] sm:$0xff] %v270
    %1863 = vst [vmem:[%s7 + $0xc8] sm:$0xff] %v272
    %1864 = vst [vmem:[%s7 + $0xd0] sm:$0xff] %v1808
    %1865 = vst [vmem:[%s7 + $0xd8] sm:$0xff] %v274
    %1866 = vst [vmem:[%s7 + $0xe0] sm:$0xff] %v276
    %1867 = vst [vmem:[%s7 + $0xe8] sm:$0xff] %v1811
    %1868 = vst [vmem:[%s7 + $0xf0] sm:$0xff] %v280
    %1869 = vst [vmem:[%s7 + $0xf8] sm:$0xff] %v282
    %1870 = vst [vmem:[%s7 + $0x100] sm:$0xff] %v1816
    %1871 = vst [vmem:[%s7 + $0x108] sm:$0xff] %v284
    %1872 = vst [vmem:[%s7 + $0x110] sm:$0xff] %v286
    %1873 = vst [vmem:[%s7 + $0x118] sm:$0xff] %v1819
    %1874 = vst [vmem:[%s7 + $0x120] sm:$0xff] %v290
    %1875 = vst [vmem:[%s7 + $0x128] sm:$0xff] %v292
    %1876 = vst [vmem:[%s7 + $0x130] sm:$0xff] %v1824
    %1877 = vst [vmem:[%s7 + $0x138] sm:$0xff] %v294
    %1878 = vst [vmem:[%s7 + $0x140] sm:$0xff] %v296
    %1879 = vst [vmem:[%s7 + $0x148] sm:$0xff] %v1827
    %1880 = vst [vmem:[%s7 + $0x150] sm:$0xff] %v300
    %1881 = vst [vmem:[%s7 + $0x158] sm:$0xff] %v302
    %1882 = vst [vmem:[%s7 + $0x160] sm:$0xff] %v1832
    %1883 = vst [vmem:[%s7 + $0x168] sm:$0xff] %v304
    %1884 = vst [vmem:[%s7 + $0x170] sm:$0xff] %v306
    %1885 = vst [vmem:[%s7 + $0x178] sm:$0xff] %v1835
    // Predicated region
    $region46: #{style_encoder_forward.1} parent=1 // pred_check
      _
    $region47: #{style_encoder_forward.1} parent=1 // pred_check_branch
      %1887 = sbr.rel (0) target = $region49
    $region48: #{style_encoder_forward.1} parent=1 // pred_region
      _
    $region49: #{style_encoder_forward.1} parent=1 // pred_fallthru
      _
    // Predicated region
    $region50: #{style_encoder_forward.1} parent=1 // pred_check
      _
    $region51: #{style_encoder_forward.1} parent=1 // pred_check_branch
      %1889 = sbr.rel (0) target = $region53
    $region52: #{style_encoder_forward.1} parent=1 // pred_region
      _
    $region53: #{style_encoder_forward.1} parent=1 // pred_fallthru
      _
    %1890 = vsyncpa [#allocation3], 1
    %1891 = vsyncpa [#allocation5], 1
    %1892 = vsyncpa [#allocation8], 1

</llo_original>
